<compile_context>
chip_gen: v5e
topology: v5e:2x2
jax: 0.10.0
libtpu: 0.0.40
codegen_flags: <defaults>
</compile_context>

<pallas_src>
import jax
import jax.numpy as jnp
from jax.experimental import pallas as pl
from jax.experimental.pallas import tpu as pltpu


def decoder_block(x, params, eps=1e-5):
    """DecoderBlock forward (inference).  x: (B, Cin, H, W) NCHW."""
    B, Cin, H, W = x.shape
    N = H * W

    w1 = params["conv1_w"][:, :, 0, 0]          # (Cmid, Cin)
    w3 = params["conv3_w"][:, :, 0, 0]          # (Cout, Cmid)
    Cmid = w1.shape[0]
    Cout = w3.shape[0]
    f32 = jnp.float32

    def fold(gamma, beta, mean, var):
        s = gamma * jax.lax.rsqrt(var + eps)
        return s, beta - s * mean

    s1, t1 = fold(*params["bn1"])
    s2, t2 = fold(*params["bn2"])
    s3, t3 = fold(*params["bn3"])

    # Fold BN scale into the conv weights, BN shift + conv bias into one bias.
    w1f = (w1 * s1[:, None]).astype(f32)                          # (Cmid, Cin)
    b1f = (s1 * params["conv1_b"] + t1)[:, None].astype(f32)      # (Cmid, 1)
    # PyTorch ConvTranspose2d weight is (Cin, Cout, kH, kW); rearrange into
    # per-tap (ky, kx, Cout, Cin) matmul matrices with the BN2 scale folded in.
    wdf = (jnp.transpose(params["deconv2_w"], (2, 3, 1, 0))
           * s2[None, None, :, None]).astype(f32)                 # (3,3,Cmid,Cmid)
    b2f = (s2 * params["deconv2_b"] + t2)[:, None].astype(f32)    # (Cmid, 1)
    w3f = (w3 * s3[:, None]).astype(f32)                          # (Cout, Cmid)
    b3f = (s3 * params["conv3_b"] + t3)[:, None].astype(f32)      # (Cout, 1)

    x_flat = x.reshape(B, Cin, N)

    def kernel(x_ref, w1_ref, b1_ref, wd_ref, b2_ref, w3_ref, b3_ref, o_ref,
               hs_ref):
        # ---- stage 1: 1x1 conv (+ folded BN1) + ReLU ------------------------
        h = jnp.dot(w1_ref[...], x_ref[0], preferred_element_type=f32)
        h = jnp.maximum(h + b1_ref[...], 0.0)                     # (Cmid, N)

        # ---- stage 2: ConvTranspose2d 3x3, stride 2, pad 1, out_pad 1 -------
        # Zero-padded copy of h so the shifted neighbours (m, n+1), (m+1, n),
        # (m+1, n+1) are plain offset reads on the flattened spatial axis.
        hs_ref[...] = jnp.zeros(hs_ref.shape, f32)
        hs_ref[:, pl.ds(0, N)] = h

        col = jax.lax.broadcasted_iota(jnp.int32, (Cmid, N), 1) % W
        in_x = col < (W - 1)                 # pixels that have a right neighbour

        a = h                                                    # h[m, n]
        ax = jnp.where(in_x, hs_ref[:, pl.ds(1, N)], 0.0)        # h[m, n+1]
        ay = hs_ref[:, pl.ds(W, N)]                              # h[m+1, n]
        axy = jnp.where(in_x, hs_ref[:, pl.ds(W + 1, N)], 0.0)   # h[m+1, n+1]

        def mm(wt, act):
            return jnp.dot(wt, act, preferred_element_type=f32)

        b2 = b2_ref[...]
        # Output parity (dy, dx): out[2m+dy, 2n+dx].
        q00 = mm(wd_ref[1, 1], a) + b2
        q01 = mm(wd_ref[1, 2], a) + mm(wd_ref[1, 0], ax) + b2
        q10 = mm(wd_ref[2, 1], a) + mm(wd_ref[0, 1], ay) + b2
        q11 = (mm(wd_ref[2, 2], a) + mm(wd_ref[2, 0], ax)
               + mm(wd_ref[0, 2], ay) + mm(wd_ref[0, 0], axy) + b2)

        # ---- stage 3: ReLU -> 1x1 conv (+ folded BN3) -> ReLU, per parity ---
        w3v = w3_ref[...]
        b3 = b3_ref[...]
        for q, quad in enumerate((q00, q01, q10, q11)):   # q = 2*dy + dx
            h2 = jnp.maximum(quad, 0.0)
            y = jnp.maximum(mm(w3v, h2) + b3, 0.0)
            o_ref[0, q] = y.astype(o_ref.dtype)

    out = pl.pallas_call(
        kernel,
        out_shape=jax.ShapeDtypeStruct((B, 4, Cout, N), x.dtype),
        grid_spec=pltpu.PrefetchScalarGridSpec(
            num_scalar_prefetch=0,
            grid=(B,),
            in_specs=[
                pl.BlockSpec((1, Cin, N), lambda b: (b, 0, 0)),            # x
                pl.BlockSpec((Cmid, Cin), lambda b: (0, 0)),               # w1
                pl.BlockSpec((Cmid, 1), lambda b: (0, 0)),                 # b1
                pl.BlockSpec((3, 3, Cmid, Cmid), lambda b: (0, 0, 0, 0)),  # taps
                pl.BlockSpec((Cmid, 1), lambda b: (0, 0)),                 # b2
                pl.BlockSpec((Cout, Cmid), lambda b: (0, 0)),              # w3
                pl.BlockSpec((Cout, 1), lambda b: (0, 0)),                 # b3
            ],
            out_specs=pl.BlockSpec((1, 4, Cout, N), lambda b: (b, 0, 0, 0)),
            scratch_shapes=[pltpu.VMEM((Cmid, N + W + 1), jnp.float32)],
        ),
        compiler_params=pltpu.CompilerParams(
            dimension_semantics=("parallel",),
        ),
    )(x_flat, w1f, b1f, wdf, b2f, w3f, b3f)

    # Depth-to-space: (B, dy, dx, Cout, H, W) -> (B, Cout, 2H, 2W). Pure layout.
    out = out.reshape(B, 2, 2, Cout, H, W)
    out = out.transpose(0, 3, 4, 1, 5, 2).reshape(B, Cout, 2 * H, 2 * W)
    return out


def decoder_block_reference(x, params, eps=1e-5):
    """Pure-JAX reference with the same (eval-mode BN) semantics."""
    def bn(v, gamma, beta, mean, var):
        inv = jax.lax.rsqrt(var + eps)
        return ((v - mean[None, :, None, None]) * inv[None, :, None, None]
                * gamma[None, :, None, None] + beta[None, :, None, None])

    h = jnp.einsum("oi,bihw->bohw", params["conv1_w"][:, :, 0, 0], x)
    h = h + params["conv1_b"][None, :, None, None]
    h = jnp.maximum(bn(h, *params["bn1"]), 0.0)

    # ConvTranspose2d(k=3, s=2, p=1, output_padding=1) as a dilated conv with
    # the (in,out,kh,kw) kernel transposed to (out,in,kh,kw) and spatially
    # flipped; padding = (k-1-p, k-1-p+output_padding) per spatial dim.
    wt = jnp.flip(jnp.transpose(params["deconv2_w"], (1, 0, 2, 3)), axis=(2, 3))
    h = jax.lax.conv_general_dilated(
        h, wt, window_strides=(1, 1), padding=((1, 2), (1, 2)),
        lhs_dilation=(2, 2), dimension_numbers=("NCHW", "OIHW", "NCHW"))
    h = h + params["deconv2_b"][None, :, None, None]
    h = jnp.maximum(bn(h, *params["bn2"]), 0.0)

    h = jnp.einsum("oi,bihw->bohw", params["conv3_w"][:, :, 0, 0], h)
    h = h + params["conv3_b"][None, :, None, None]
    h = jnp.maximum(bn(h, *params["bn3"]), 0.0)
    return h


if __name__ == "__main__":
    B, in_channels, n_filters, H, W = 2, 16, 8, 16, 16
    Cmid = in_channels // 4

    key = jax.random.PRNGKey(0)
    ks = jax.random.split(key, 10)

    def make_bn(k, c):
        k1, k2, k3, k4 = jax.random.split(k, 4)
        return (1.0 + 0.1 * jax.random.normal(k1, (c,), jnp.float32),   # gamma
                0.1 * jax.random.normal(k2, (c,), jnp.float32),         # beta
                0.1 * jax.random.normal(k3, (c,), jnp.float32),         # mean
                jax.random.uniform(k4, (c,), jnp.float32, 0.5, 1.5))    # var

    x = jax.random.normal(ks[0], (B, in_channels, H, W), dtype=jnp.float32)
    params = {
        "conv1_w": jax.random.normal(ks[1], (Cmid, in_channels, 1, 1),
                                     jnp.float32) * (1.0 / in_channels ** 0.5),
        "conv1_b": 0.1 * jax.random.normal(ks[2], (Cmid,), jnp.float32),
        "bn1": make_bn(ks[3], Cmid),
        "deconv2_w": jax.random.normal(ks[4], (Cmid, Cmid, 3, 3),
                                       jnp.float32) * (1.0 / (9.0 * Cmid) ** 0.5),
        "deconv2_b": 0.1 * jax.random.normal(ks[5], (Cmid,), jnp.float32),
        "bn2": make_bn(ks[6], Cmid),
        "conv3_w": jax.random.normal(ks[7], (n_filters, Cmid, 1, 1),
                                     jnp.float32) * (1.0 / Cmid ** 0.5),
        "conv3_b": 0.1 * jax.random.normal(ks[8], (n_filters,), jnp.float32),
        "bn3": make_bn(ks[9], n_filters),
    }

    out = decoder_block(x, params)
    jax.block_until_ready(out)

    ref = decoder_block_reference(x, params)
    assert out.shape == (B, n_filters, 2 * H, 2 * W), out.shape
    assert jnp.allclose(out, ref, atol=1e-3, rtol=1e-3), \
        float(jnp.max(jnp.abs(out - ref)))

    print("KERNEL_OK")
</pallas_src>

<mosaic_0001>
module attributes {stable_mosaic.version = 11 : i64} {
  func.func @kernel(%arg0: i32, %arg1: memref<1x16x256xf32, #tpu.memory_space<vmem>>, %arg2: memref<4x16xf32, #tpu.memory_space<vmem>>, %arg3: memref<4x1xf32, #tpu.memory_space<vmem>>, %arg4: memref<3x3x4x4xf32, #tpu.memory_space<vmem>>, %arg5: memref<4x1xf32, #tpu.memory_space<vmem>>, %arg6: memref<8x4xf32, #tpu.memory_space<vmem>>, %arg7: memref<8x1xf32, #tpu.memory_space<vmem>>, %arg8: memref<1x4x8x256xf32, #tpu.memory_space<vmem>>, %arg9: memref<4x273xf32, #tpu.memory_space<vmem>>) attributes {dimension_semantics = [#tpu.dimension_semantics<parallel>], iteration_bounds = array<i64: 2>, scalar_prefetch = 0 : i64, scratch_operands = 1 : i64, tpu.core_type = #tpu.core_type<tc>, window_params = [{transform_indices = @transform_0, window_bounds = array<i64: 1, 16, 256>}, {pipeline_mode = #tpu.pipeline_mode<synchronous>, transform_indices = @transform_1, window_bounds = array<i64: 4, 16>}, {pipeline_mode = #tpu.pipeline_mode<synchronous>, transform_indices = @transform_2, window_bounds = array<i64: 4, 1>}, {pipeline_mode = #tpu.pipeline_mode<synchronous>, transform_indices = @transform_3, window_bounds = array<i64: 3, 3, 4, 4>}, {pipeline_mode = #tpu.pipeline_mode<synchronous>, transform_indices = @transform_4, window_bounds = array<i64: 4, 1>}, {pipeline_mode = #tpu.pipeline_mode<synchronous>, transform_indices = @transform_5, window_bounds = array<i64: 8, 4>}, {pipeline_mode = #tpu.pipeline_mode<synchronous>, transform_indices = @transform_6, window_bounds = array<i64: 8, 1>}, {transform_indices = @transform_7, window_bounds = array<i64: 1, 4, 8, 256>}]} {
    %c0 = arith.constant 0 : index
    %c0_0 = arith.constant 0 : index
    %0 = vector.load %arg2[%c0, %c0_0] : memref<4x16xf32, #tpu.memory_space<vmem>>, vector<4x16xf32>
    %c0_1 = arith.constant 0 : index
    %c0_2 = arith.constant 0 : index
    %c0_3 = arith.constant 0 : index
    %1 = vector.load %arg1[%c0_1, %c0_2, %c0_3] : memref<1x16x256xf32, #tpu.memory_space<vmem>>, vector<1x16x256xf32>
    %2 = vector.shape_cast %1 : vector<1x16x256xf32> to vector<16x256xf32>
    %cst = arith.constant dense<0.000000e+00> : vector<4x256xf32>
    %3 = tpu.matmul %0, %2, %cst {dimension_numbers = #tpu.dot_dimension_numbers<[1], [0], [0], [1], [0, 0, 1, 1], [], []>} : vector<4x16xf32>, vector<16x256xf32>, vector<4x256xf32> -> vector<4x256xf32>
    %c0_4 = arith.constant 0 : index
    %c0_5 = arith.constant 0 : index
    %4 = vector.load %arg3[%c0_4, %c0_5] : memref<4x1xf32, #tpu.memory_space<vmem>>, vector<4x1xf32>
    %5 = vector.broadcast %4 : vector<4x1xf32> to vector<4x256xf32>
    %6 = arith.addf %3, %5 : vector<4x256xf32>
    %cst_6 = arith.constant 0.000000e+00 : f32
    %7 = vector.broadcast %cst_6 : f32 to vector<4x256xf32>
    %8 = arith.maximumf %6, %7 : vector<4x256xf32>
    %cst_7 = arith.constant 0.000000e+00 : f32
    %9 = vector.broadcast %cst_7 : f32 to vector<4x273xf32>
    %c0_8 = arith.constant 0 : index
    %c0_9 = arith.constant 0 : index
    %10 = vector.load %arg9[%c0_8, %c0_9] : memref<4x273xf32, #tpu.memory_space<vmem>>, vector<4x273xf32>
    tpu.vector_store %arg9[%c0_8, %c0_9], %9 {strides = array<i32>} : memref<4x273xf32, #tpu.memory_space<vmem>>, vector<4x273xf32>,
    %c0_10 = arith.constant 0 : index
    %c0_11 = arith.constant 0 : index
    %11 = vector.load %arg9[%c0_10, %c0_11] : memref<4x273xf32, #tpu.memory_space<vmem>>, vector<4x256xf32>
    tpu.vector_store %arg9[%c0_10, %c0_11], %8 {strides = array<i32>} : memref<4x273xf32, #tpu.memory_space<vmem>>, vector<4x256xf32>,
    %12 = tpu.iota {dimensions = array<i32: 1>} : vector<4x256xi32>
    %c16_i32 = arith.constant 16 : i32
    %c0_i32 = arith.constant 0 : i32
    %13 = arith.cmpi eq, %c16_i32, %c0_i32 : i32
    %c1_i32 = arith.constant 1 : i32
    %14 = arith.select %13, %c1_i32, %c16_i32 : i32
    %15 = vector.broadcast %14 : i32 to vector<4x256xi32>
    %16 = arith.remsi %12, %15 : vector<4x256xi32>
    %c0_i32_12 = arith.constant 0 : i32
    %17 = vector.broadcast %c0_i32_12 : i32 to vector<4x256xi32>
    %18 = arith.cmpi ne, %16, %17 : vector<4x256xi32>
    %c0_i32_13 = arith.constant 0 : i32
    %19 = vector.broadcast %c0_i32_13 : i32 to vector<4x256xi32>
    %20 = arith.cmpi slt, %16, %19 : vector<4x256xi32>
    %c0_i32_14 = arith.constant 0 : i32
    %21 = arith.cmpi slt, %14, %c0_i32_14 : i32
    %22 = vector.broadcast %21 : i1 to vector<4x256xi1>
    %23 = vector.broadcast %22 : vector<4x256xi1> to vector<4x256xi1>
    %24 = arith.xori %20, %23 : vector<4x256xi1>
    %25 = arith.andi %24, %18 : vector<4x256xi1>
    %26 = vector.broadcast %14 : i32 to vector<4x256xi32>
    %27 = arith.addi %16, %26 : vector<4x256xi32>
    %28 = arith.select %25, %27, %16 : vector<4x256xi1>, vector<4x256xi32>
    %c15_i32 = arith.constant 15 : i32
    %29 = vector.broadcast %c15_i32 : i32 to vector<4x256xi32>
    %30 = arith.cmpi slt, %28, %29 : vector<4x256xi32>
    %c0_15 = arith.constant 0 : index
    %c1 = arith.constant 1 : index
    %31 = vector.load %arg9[%c0_15, %c1] : memref<4x273xf32, #tpu.memory_space<vmem>>, vector<4x256xf32>
    %cst_16 = arith.constant 0.000000e+00 : f32
    %32 = vector.broadcast %cst_16 : f32 to vector<4x256xf32>
    %33 = arith.select %30, %31, %32 : vector<4x256xi1>, vector<4x256xf32>
    %c0_17 = arith.constant 0 : index
    %c16 = arith.constant 16 : index
    %34 = vector.load %arg9[%c0_17, %c16] : memref<4x273xf32, #tpu.memory_space<vmem>>, vector<4x256xf32>
    %c0_18 = arith.constant 0 : index
    %c17 = arith.constant 17 : index
    %35 = vector.load %arg9[%c0_18, %c17] : memref<4x273xf32, #tpu.memory_space<vmem>>, vector<4x256xf32>
    %cst_19 = arith.constant 0.000000e+00 : f32
    %36 = vector.broadcast %cst_19 : f32 to vector<4x256xf32>
    %37 = arith.select %30, %35, %36 : vector<4x256xi1>, vector<4x256xf32>
    %c0_20 = arith.constant 0 : index
    %c0_21 = arith.constant 0 : index
    %38 = vector.load %arg5[%c0_20, %c0_21] : memref<4x1xf32, #tpu.memory_space<vmem>>, vector<4x1xf32>
    %c1_22 = arith.constant 1 : index
    %c1_23 = arith.constant 1 : index
    %c0_24 = arith.constant 0 : index
    %c0_25 = arith.constant 0 : index
    %39 = vector.load %arg4[%c1_22, %c1_23, %c0_24, %c0_25] : memref<3x3x4x4xf32, #tpu.memory_space<vmem>>, vector<1x1x4x4xf32>
    %40 = vector.shape_cast %39 : vector<1x1x4x4xf32> to vector<4x4xf32>
    %cst_26 = arith.constant dense<0.000000e+00> : vector<4x256xf32>
    %41 = tpu.matmul %40, %8, %cst_26 {dimension_numbers = #tpu.dot_dimension_numbers<[1], [0], [0], [1], [0, 0, 1, 1], [], []>} : vector<4x4xf32>, vector<4x256xf32>, vector<4x256xf32> -> vector<4x256xf32>
    %42 = vector.broadcast %38 : vector<4x1xf32> to vector<4x256xf32>
    %43 = arith.addf %41, %42 : vector<4x256xf32>
    %c1_27 = arith.constant 1 : index
    %c2 = arith.constant 2 : index
    %c0_28 = arith.constant 0 : index
    %c0_29 = arith.constant 0 : index
    %44 = vector.load %arg4[%c1_27, %c2, %c0_28, %c0_29] : memref<3x3x4x4xf32, #tpu.memory_space<vmem>>, vector<1x1x4x4xf32>
    %45 = vector.shape_cast %44 : vector<1x1x4x4xf32> to vector<4x4xf32>
    %cst_30 = arith.constant dense<0.000000e+00> : vector<4x256xf32>
    %46 = tpu.matmul %45, %8, %cst_30 {dimension_numbers = #tpu.dot_dimension_numbers<[1], [0], [0], [1], [0, 0, 1, 1], [], []>} : vector<4x4xf32>, vector<4x256xf32>, vector<4x256xf32> -> vector<4x256xf32>
    %c1_31 = arith.constant 1 : index
    %c0_32 = arith.constant 0 : index
    %c0_33 = arith.constant 0 : index
    %c0_34 = arith.constant 0 : index
    %47 = vector.load %arg4[%c1_31, %c0_32, %c0_33, %c0_34] : memref<3x3x4x4xf32, #tpu.memory_space<vmem>>, vector<1x1x4x4xf32>
    %48 = vector.shape_cast %47 : vector<1x1x4x4xf32> to vector<4x4xf32>
    %cst_35 = arith.constant dense<0.000000e+00> : vector<4x256xf32>
    %49 = tpu.matmul %48, %33, %cst_35 {dimension_numbers = #tpu.dot_dimension_numbers<[1], [0], [0], [1], [0, 0, 1, 1], [], []>} : vector<4x4xf32>, vector<4x256xf32>, vector<4x256xf32> -> vector<4x256xf32>
    %50 = arith.addf %46, %49 : vector<4x256xf32>
    %51 = vector.broadcast %38 : vector<4x1xf32> to vector<4x256xf32>
    %52 = arith.addf %50, %51 : vector<4x256xf32>
    %c2_36 = arith.constant 2 : index
    %c1_37 = arith.constant 1 : index
    %c0_38 = arith.constant 0 : index
    %c0_39 = arith.constant 0 : index
    %53 = vector.load %arg4[%c2_36, %c1_37, %c0_38, %c0_39] : memref<3x3x4x4xf32, #tpu.memory_space<vmem>>, vector<1x1x4x4xf32>
    %54 = vector.shape_cast %53 : vector<1x1x4x4xf32> to vector<4x4xf32>
    %cst_40 = arith.constant dense<0.000000e+00> : vector<4x256xf32>
    %55 = tpu.matmul %54, %8, %cst_40 {dimension_numbers = #tpu.dot_dimension_numbers<[1], [0], [0], [1], [0, 0, 1, 1], [], []>} : vector<4x4xf32>, vector<4x256xf32>, vector<4x256xf32> -> vector<4x256xf32>
    %c0_41 = arith.constant 0 : index
    %c1_42 = arith.constant 1 : index
    %c0_43 = arith.constant 0 : index
    %c0_44 = arith.constant 0 : index
    %56 = vector.load %arg4[%c0_41, %c1_42, %c0_43, %c0_44] : memref<3x3x4x4xf32, #tpu.memory_space<vmem>>, vector<1x1x4x4xf32>
    %57 = vector.shape_cast %56 : vector<1x1x4x4xf32> to vector<4x4xf32>
    %cst_45 = arith.constant dense<0.000000e+00> : vector<4x256xf32>
    %58 = tpu.matmul %57, %34, %cst_45 {dimension_numbers = #tpu.dot_dimension_numbers<[1], [0], [0], [1], [0, 0, 1, 1], [], []>} : vector<4x4xf32>, vector<4x256xf32>, vector<4x256xf32> -> vector<4x256xf32>
    %59 = arith.addf %55, %58 : vector<4x256xf32>
    %60 = vector.broadcast %38 : vector<4x1xf32> to vector<4x256xf32>
    %61 = arith.addf %59, %60 : vector<4x256xf32>
    %c2_46 = arith.constant 2 : index
    %c2_47 = arith.constant 2 : index
    %c0_48 = arith.constant 0 : index
    %c0_49 = arith.constant 0 : index
    %62 = vector.load %arg4[%c2_46, %c2_47, %c0_48, %c0_49] : memref<3x3x4x4xf32, #tpu.memory_space<vmem>>, vector<1x1x4x4xf32>
    %63 = vector.shape_cast %62 : vector<1x1x4x4xf32> to vector<4x4xf32>
    %cst_50 = arith.constant dense<0.000000e+00> : vector<4x256xf32>
    %64 = tpu.matmul %63, %8, %cst_50 {dimension_numbers = #tpu.dot_dimension_numbers<[1], [0], [0], [1], [0, 0, 1, 1], [], []>} : vector<4x4xf32>, vector<4x256xf32>, vector<4x256xf32> -> vector<4x256xf32>
    %c2_51 = arith.constant 2 : index
    %c0_52 = arith.constant 0 : index
    %c0_53 = arith.constant 0 : index
    %c0_54 = arith.constant 0 : index
    %65 = vector.load %arg4[%c2_51, %c0_52, %c0_53, %c0_54] : memref<3x3x4x4xf32, #tpu.memory_space<vmem>>, vector<1x1x4x4xf32>
    %66 = vector.shape_cast %65 : vector<1x1x4x4xf32> to vector<4x4xf32>
    %cst_55 = arith.constant dense<0.000000e+00> : vector<4x256xf32>
    %67 = tpu.matmul %66, %33, %cst_55 {dimension_numbers = #tpu.dot_dimension_numbers<[1], [0], [0], [1], [0, 0, 1, 1], [], []>} : vector<4x4xf32>, vector<4x256xf32>, vector<4x256xf32> -> vector<4x256xf32>
    %68 = arith.addf %64, %67 : vector<4x256xf32>
    %c0_56 = arith.constant 0 : index
    %c2_57 = arith.constant 2 : index
    %c0_58 = arith.constant 0 : index
    %c0_59 = arith.constant 0 : index
    %69 = vector.load %arg4[%c0_56, %c2_57, %c0_58, %c0_59] : memref<3x3x4x4xf32, #tpu.memory_space<vmem>>, vector<1x1x4x4xf32>
    %70 = vector.shape_cast %69 : vector<1x1x4x4xf32> to vector<4x4xf32>
    %cst_60 = arith.constant dense<0.000000e+00> : vector<4x256xf32>
    %71 = tpu.matmul %70, %34, %cst_60 {dimension_numbers = #tpu.dot_dimension_numbers<[1], [0], [0], [1], [0, 0, 1, 1], [], []>} : vector<4x4xf32>, vector<4x256xf32>, vector<4x256xf32> -> vector<4x256xf32>
    %72 = arith.addf %68, %71 : vector<4x256xf32>
    %c0_61 = arith.constant 0 : index
    %c0_62 = arith.constant 0 : index
    %c0_63 = arith.constant 0 : index
    %c0_64 = arith.constant 0 : index
    %73 = vector.load %arg4[%c0_61, %c0_62, %c0_63, %c0_64] : memref<3x3x4x4xf32, #tpu.memory_space<vmem>>, vector<1x1x4x4xf32>
    %74 = vector.shape_cast %73 : vector<1x1x4x4xf32> to vector<4x4xf32>
    %cst_65 = arith.constant dense<0.000000e+00> : vector<4x256xf32>
    %75 = tpu.matmul %74, %37, %cst_65 {dimension_numbers = #tpu.dot_dimension_numbers<[1], [0], [0], [1], [0, 0, 1, 1], [], []>} : vector<4x4xf32>, vector<4x256xf32>, vector<4x256xf32> -> vector<4x256xf32>
    %76 = arith.addf %72, %75 : vector<4x256xf32>
    %77 = vector.broadcast %38 : vector<4x1xf32> to vector<4x256xf32>
    %78 = arith.addf %76, %77 : vector<4x256xf32>
    %c0_66 = arith.constant 0 : index
    %c0_67 = arith.constant 0 : index
    %79 = vector.load %arg6[%c0_66, %c0_67] : memref<8x4xf32, #tpu.memory_space<vmem>>, vector<8x4xf32>
    %c0_68 = arith.constant 0 : index
    %c0_69 = arith.constant 0 : index
    %80 = vector.load %arg7[%c0_68, %c0_69] : memref<8x1xf32, #tpu.memory_space<vmem>>, vector<8x1xf32>
    %cst_70 = arith.constant 0.000000e+00 : f32
    %81 = vector.broadcast %cst_70 : f32 to vector<4x256xf32>
    %82 = arith.maximumf %43, %81 : vector<4x256xf32>
    %cst_71 = arith.constant dense<0.000000e+00> : vector<8x256xf32>
    %83 = tpu.matmul %79, %82, %cst_71 {dimension_numbers = #tpu.dot_dimension_numbers<[1], [0], [0], [1], [0, 0, 1, 1], [], []>} : vector<8x4xf32>, vector<4x256xf32>, vector<8x256xf32> -> vector<8x256xf32>
    %84 = vector.broadcast %80 : vector<8x1xf32> to vector<8x256xf32>
    %85 = arith.addf %83, %84 : vector<8x256xf32>
    %cst_72 = arith.constant 0.000000e+00 : f32
    %86 = vector.broadcast %cst_72 : f32 to vector<8x256xf32>
    %87 = arith.maximumf %85, %86 : vector<8x256xf32>
    %c0_73 = arith.constant 0 : index
    %c0_74 = arith.constant 0 : index
    %c0_75 = arith.constant 0 : index
    %c0_76 = arith.constant 0 : index
    %88 = vector.load %arg8[%c0_73, %c0_74, %c0_75, %c0_76] : memref<1x4x8x256xf32, #tpu.memory_space<vmem>>, vector<1x1x8x256xf32>
    %89 = vector.shape_cast %88 : vector<1x1x8x256xf32> to vector<8x256xf32>
    %90 = vector.shape_cast %87 : vector<8x256xf32> to vector<1x1x8x256xf32>
    tpu.vector_store %arg8[%c0_73, %c0_74, %c0_75, %c0_76], %90 {strides = array<i32>} : memref<1x4x8x256xf32, #tpu.memory_space<vmem>>, vector<1x1x8x256xf32>,
    %cst_77 = arith.constant 0.000000e+00 : f32
    %91 = vector.broadcast %cst_77 : f32 to vector<4x256xf32>
    %92 = arith.maximumf %52, %91 : vector<4x256xf32>
    %cst_78 = arith.constant dense<0.000000e+00> : vector<8x256xf32>
    %93 = tpu.matmul %79, %92, %cst_78 {dimension_numbers = #tpu.dot_dimension_numbers<[1], [0], [0], [1], [0, 0, 1, 1], [], []>} : vector<8x4xf32>, vector<4x256xf32>, vector<8x256xf32> -> vector<8x256xf32>
    %94 = vector.broadcast %80 : vector<8x1xf32> to vector<8x256xf32>
    %95 = arith.addf %93, %94 : vector<8x256xf32>
    %cst_79 = arith.constant 0.000000e+00 : f32
    %96 = vector.broadcast %cst_79 : f32 to vector<8x256xf32>
    %97 = arith.maximumf %95, %96 : vector<8x256xf32>
    %c0_80 = arith.constant 0 : index
    %c1_81 = arith.constant 1 : index
    %c0_82 = arith.constant 0 : index
    %c0_83 = arith.constant 0 : index
    %98 = vector.load %arg8[%c0_80, %c1_81, %c0_82, %c0_83] : memref<1x4x8x256xf32, #tpu.memory_space<vmem>>, vector<1x1x8x256xf32>
    %99 = vector.shape_cast %98 : vector<1x1x8x256xf32> to vector<8x256xf32>
    %100 = vector.shape_cast %97 : vector<8x256xf32> to vector<1x1x8x256xf32>
    tpu.vector_store %arg8[%c0_80, %c1_81, %c0_82, %c0_83], %100 {strides = array<i32>} : memref<1x4x8x256xf32, #tpu.memory_space<vmem>>, vector<1x1x8x256xf32>,
    %cst_84 = arith.constant 0.000000e+00 : f32
    %101 = vector.broadcast %cst_84 : f32 to vector<4x256xf32>
    %102 = arith.maximumf %61, %101 : vector<4x256xf32>
    %cst_85 = arith.constant dense<0.000000e+00> : vector<8x256xf32>
    %103 = tpu.matmul %79, %102, %cst_85 {dimension_numbers = #tpu.dot_dimension_numbers<[1], [0], [0], [1], [0, 0, 1, 1], [], []>} : vector<8x4xf32>, vector<4x256xf32>, vector<8x256xf32> -> vector<8x256xf32>
    %104 = vector.broadcast %80 : vector<8x1xf32> to vector<8x256xf32>
    %105 = arith.addf %103, %104 : vector<8x256xf32>
    %cst_86 = arith.constant 0.000000e+00 : f32
    %106 = vector.broadcast %cst_86 : f32 to vector<8x256xf32>
    %107 = arith.maximumf %105, %106 : vector<8x256xf32>
    %c0_87 = arith.constant 0 : index
    %c2_88 = arith.constant 2 : index
    %c0_89 = arith.constant 0 : index
    %c0_90 = arith.constant 0 : index
    %108 = vector.load %arg8[%c0_87, %c2_88, %c0_89, %c0_90] : memref<1x4x8x256xf32, #tpu.memory_space<vmem>>, vector<1x1x8x256xf32>
    %109 = vector.shape_cast %108 : vector<1x1x8x256xf32> to vector<8x256xf32>
    %110 = vector.shape_cast %107 : vector<8x256xf32> to vector<1x1x8x256xf32>
    tpu.vector_store %arg8[%c0_87, %c2_88, %c0_89, %c0_90], %110 {strides = array<i32>} : memref<1x4x8x256xf32, #tpu.memory_space<vmem>>, vector<1x1x8x256xf32>,
    %cst_91 = arith.constant 0.000000e+00 : f32
    %111 = vector.broadcast %cst_91 : f32 to vector<4x256xf32>
    %112 = arith.maximumf %78, %111 : vector<4x256xf32>
    %cst_92 = arith.constant dense<0.000000e+00> : vector<8x256xf32>
    %113 = tpu.matmul %79, %112, %cst_92 {dimension_numbers = #tpu.dot_dimension_numbers<[1], [0], [0], [1], [0, 0, 1, 1], [], []>} : vector<8x4xf32>, vector<4x256xf32>, vector<8x256xf32> -> vector<8x256xf32>
    %114 = vector.broadcast %80 : vector<8x1xf32> to vector<8x256xf32>
    %115 = arith.addf %113, %114 : vector<8x256xf32>
    %cst_93 = arith.constant 0.000000e+00 : f32
    %116 = vector.broadcast %cst_93 : f32 to vector<8x256xf32>
    %117 = arith.maximumf %115, %116 : vector<8x256xf32>
    %c0_94 = arith.constant 0 : index
    %c3 = arith.constant 3 : index
    %c0_95 = arith.constant 0 : index
    %c0_96 = arith.constant 0 : index
    %118 = vector.load %arg8[%c0_94, %c3, %c0_95, %c0_96] : memref<1x4x8x256xf32, #tpu.memory_space<vmem>>, vector<1x1x8x256xf32>
    %119 = vector.shape_cast %118 : vector<1x1x8x256xf32> to vector<8x256xf32>
    %120 = vector.shape_cast %117 : vector<8x256xf32> to vector<1x1x8x256xf32>
    tpu.vector_store %arg8[%c0_94, %c3, %c0_95, %c0_96], %120 {strides = array<i32>} : memref<1x4x8x256xf32, #tpu.memory_space<vmem>>, vector<1x1x8x256xf32>,
    return
  }
  func.func @transform_0(%arg0: i32) -> (i32, i32, i32) {
    %c0_i32 = arith.constant 0 : i32
    %c0_i32_0 = arith.constant 0 : i32
    %c0_i32_1 = arith.constant 0 : i32
    return %arg0, %c0_i32, %c0_i32_0 : i32, i32, i32
  }
  func.func @transform_1(%arg0: i32) -> (i32, i32) {
    %c0_i32 = arith.constant 0 : i32
    %c0_i32_0 = arith.constant 0 : i32
    %c0_i32_1 = arith.constant 0 : i32
    return %c0_i32, %c0_i32_0 : i32, i32
  }
  func.func @transform_2(%arg0: i32) -> (i32, i32) {
    %c0_i32 = arith.constant 0 : i32
    %c0_i32_0 = arith.constant 0 : i32
    %c0_i32_1 = arith.constant 0 : i32
    return %c0_i32, %c0_i32_0 : i32, i32
  }
  func.func @transform_3(%arg0: i32) -> (i32, i32, i32, i32) {
    %c0_i32 = arith.constant 0 : i32
    %c0_i32_0 = arith.constant 0 : i32
    %c0_i32_1 = arith.constant 0 : i32
    %c0_i32_2 = arith.constant 0 : i32
    %c0_i32_3 = arith.constant 0 : i32
    return %c0_i32, %c0_i32_0, %c0_i32_1, %c0_i32_2 : i32, i32, i32, i32
  }
  func.func @transform_4(%arg0: i32) -> (i32, i32) {
    %c0_i32 = arith.constant 0 : i32
    %c0_i32_0 = arith.constant 0 : i32
    %c0_i32_1 = arith.constant 0 : i32
    return %c0_i32, %c0_i32_0 : i32, i32
  }
  func.func @transform_5(%arg0: i32) -> (i32, i32) {
    %c0_i32 = arith.constant 0 : i32
    %c0_i32_0 = arith.constant 0 : i32
    %c0_i32_1 = arith.constant 0 : i32
    return %c0_i32, %c0_i32_0 : i32, i32
  }
  func.func @transform_6(%arg0: i32) -> (i32, i32) {
    %c0_i32 = arith.constant 0 : i32
    %c0_i32_0 = arith.constant 0 : i32
    %c0_i32_1 = arith.constant 0 : i32
    return %c0_i32, %c0_i32_0 : i32, i32
  }
  func.func @transform_7(%arg0: i32) -> (i32, i32, i32, i32) {
    %c0_i32 = arith.constant 0 : i32
    %c0_i32_0 = arith.constant 0 : i32
    %c0_i32_1 = arith.constant 0 : i32
    %c0_i32_2 = arith.constant 0 : i32
    return %arg0, %c0_i32, %c0_i32_0, %c0_i32_1 : i32, i32, i32, i32
  }
}

</mosaic_0001>

<llo_original>
// kernel: tpu_custom_call.1
$region0: #{tpu_custom_call.1}
  #allocation0 [shape = 'u32[]', space=smem, size = 0x4, offset = 0x4, fixed_abs, tag = 'smem constant byte address 0x4 - core index']
  #allocation1 [shape = 'u32[72,128]{1,0:T(1,128)}', space=vmem, size = 0x9000, scoped, tag = 'internal scratch']
  #allocation2 [shape = 'f32[4,273]{1,0:T(4,128)}', space=vmem, size = 0x1800, scoped, tag = 'scratch operand']
  %s0 = inlined_call_operand.hbm [shape: f32[2,16,256], index: 0, kind: input, shape index: {}]
  %s1 = inlined_call_operand.vmem [shape: f32[4,16], index: 1, kind: input, shape index: {}]
  %s2 = inlined_call_operand.vmem [shape: f32[4,1], index: 2, kind: input, shape index: {}]
  %s3 = inlined_call_operand.hbm [shape: f32[3,3,4,4], index: 3, kind: input, shape index: {}]
  %s4 = inlined_call_operand.vmem [shape: f32[4,1], index: 4, kind: input, shape index: {}]
  %s5 = inlined_call_operand.vmem [shape: f32[8,4], index: 5, kind: input, shape index: {}]
  %s6 = inlined_call_operand.vmem [shape: f32[8,1], index: 6, kind: input, shape index: {}]
  %s7 = inlined_call_operand.hbm [shape: f32[2,4,8,256], index: 7, kind: output, shape index: {}]
  %s8 = sld [smem:[#allocation0]]
  $region69: #{tpu_custom_call.1} parent=0
    _
  %s10 = ssub.s32 1, %s8
  %s11 = scalar_select 0, %s10, %s8
  $region1: #{tpu_custom_call.1} parent=0
    #allocation3 [shape = 'u8[32768]{0}', space=vmem, size = 0x8000, scoped, tag = 'input window, operand 0']
    #allocation4 [shape = 's32[2]{0}', space=sflag, size = 0x8, scoped, tag = 'scoped memory for tpu_custom_call.1']
    #allocation5 [shape = 's32[2]{0}', space=sflag, size = 0x8, scoped, tag = 'scoped memory for tpu_custom_call.1']
    #allocation6 [shape = 'u8[18432]{0}', space=vmem, size = 0x4800, scoped, tag = 'input window, operand 3, single buffered']
    #allocation7 [shape = 's32[1]{0}', space=sflag, size = 0x4, scoped, tag = 'scoped memory for tpu_custom_call.1']
    #allocation8 [shape = 'u8[65536]{0}', space=vmem, size = 0x10000, scoped, tag = 'output window, operand 0']
    %12 = vsyncpa [#allocation4], 0
    %s13 = scalar_lea.sflag [#allocation4], 1
    %14 = vsyncpa %s13, 0
    %15 = vsyncpa [#allocation7], 0
    %16 = vsyncpa [#allocation5], 0
    %s17 = scalar_lea.sflag [#allocation5], 1
    %18 = vsyncpa %s17, 0
    loop: start=0, step=1, limit=4
    $region2: #{tpu_custom_call.1} parent=1 // loop_pre_header
      _
    $region3: #{tpu_custom_call.1} parent=1 // loop_header
      %s20 = sphi 0, %s24
      %p21 = scmp.ge.s32.totalorder %s20, 4
      %s30 = sphi 0, %s32
      %s33 = sphi 0, %s30
      %s34 = sphi 0, %s33
      %s50 = sphi 0, %s34
      %s54 = sphi 0, %s54
      %s56 = sphi 0, %s54
      %s57 = sphi 0, %s56
      %s71 = sphi 0, %s57
      %s75 = sphi 0, %s75
      %s77 = sphi 0, %s75
      %s78 = sphi 0, %s77
      %s92 = sphi 0, %s78
      %s96 = sphi 0, %s96
      %s98 = sphi 0, %s96
      %s99 = sphi 0, %s98
      %s113 = sphi 0, %s99
      %s117 = sphi 0, %s117
      %s119 = sphi 0, %s117
      %s120 = sphi 0, %s119
      %s134 = sphi 0, %s120
      %s138 = sphi 0, %s138
      %s140 = sphi 0, %s138
      %s141 = sphi 0, %s140
      %s155 = sphi 0, %s141
      %s159 = sphi 0, %s159
      %s161 = sphi 0, %s159
      %s162 = sphi 0, %s161
      %s176 = sphi 0, %s162
      %s182 = sphi 0, %s184
      %s185 = sphi 0, %s182
      %s186 = sphi 0, %s185
      %s202 = sphi 0, %s186
    $region4: #{tpu_custom_call.1} parent=1 // loop_header_branch
      %23 = sbr.rel (%p21) target = $region8
    $region5: #{tpu_custom_call.1} parent=1 // loop_body
      %s25 = ssub.s32 %s20, 1
      %s26 = ssub.s32 %s20, 2
      %s27 = sadd.s32 %s20, 1
      %s28 = ssub.s32 %s20, %s27
      %p29 = scmp.eq.s32.totalorder %s28, 0
      %s31 = sadd.s32 %s30, 1
      %s32 = scalar_select %p29, %s30, %s31
      %p35 = pneg %p29
      %p36 = scmp.eq.s32.totalorder %s20, 1
      %p37 = por %p35, %p36
      %p38 = scmp.ne.s32.totalorder %s30, %s33
      %p39 = scmp.eq.s32.totalorder %s20, 0
      %p40 = por %p38, %p39
      %p41 = scmp.ne.s32.totalorder %s30, %s33
      %p42 = scmp.eq.s32.totalorder %s25, 1
      %p43 = por %p41, %p42
      %p44 = scmp.ne.s32.totalorder %s33, %s34
      %p45 = scmp.eq.s32.totalorder %s25, 0
      %p46 = por %p44, %p45
      %p47 = scmp.ne.s32.totalorder %s33, %s34
      %p48 = scmp.eq.s32.totalorder %s26, 1
      %p49 = por %p47, %p48
      %p51 = scmp.ne.s32.totalorder %s34, %s50
      %p52 = scmp.eq.s32.totalorder %s26, 0
      %p53 = por %p51, %p52
      %s55 = sadd.s32 %s54, 1
      %p58 = scmp.eq.s32.totalorder %s20, 1
      %p59 = scmp.ne.s32.totalorder %s54, %s56
      %p60 = scmp.eq.s32.totalorder %s20, 0
      %p61 = por %p59, %p60
      %p62 = scmp.ne.s32.totalorder %s54, %s56
      %p63 = scmp.eq.s32.totalorder %s25, 1
      %p64 = por %p62, %p63
      %p65 = scmp.ne.s32.totalorder %s56, %s57
      %p66 = scmp.eq.s32.totalorder %s25, 0
      %p67 = por %p65, %p66
      %p68 = scmp.ne.s32.totalorder %s56, %s57
      %p69 = scmp.eq.s32.totalorder %s26, 1
      %p70 = por %p68, %p69
      %p72 = scmp.ne.s32.totalorder %s57, %s71
      %p73 = scmp.eq.s32.totalorder %s26, 0
      %p74 = por %p72, %p73
      %s76 = sadd.s32 %s75, 1
      %p79 = scmp.eq.s32.totalorder %s20, 1
      %p80 = scmp.ne.s32.totalorder %s75, %s77
      %p81 = scmp.eq.s32.totalorder %s20, 0
      %p82 = por %p80, %p81
      %p83 = scmp.ne.s32.totalorder %s75, %s77
      %p84 = scmp.eq.s32.totalorder %s25, 1
      %p85 = por %p83, %p84
      %p86 = scmp.ne.s32.totalorder %s77, %s78
      %p87 = scmp.eq.s32.totalorder %s25, 0
      %p88 = por %p86, %p87
      %p89 = scmp.ne.s32.totalorder %s77, %s78
      %p90 = scmp.eq.s32.totalorder %s26, 1
      %p91 = por %p89, %p90
      %p93 = scmp.ne.s32.totalorder %s78, %s92
      %p94 = scmp.eq.s32.totalorder %s26, 0
      %p95 = por %p93, %p94
      %s97 = sadd.s32 %s96, 1
      %p100 = scmp.eq.s32.totalorder %s20, 1
      %p101 = scmp.ne.s32.totalorder %s96, %s98
      %p102 = scmp.eq.s32.totalorder %s20, 0
      %p103 = por %p101, %p102
      %p104 = scmp.ne.s32.totalorder %s96, %s98
      %p105 = scmp.eq.s32.totalorder %s25, 1
      %p106 = por %p104, %p105
      %p107 = scmp.ne.s32.totalorder %s98, %s99
      %p108 = scmp.eq.s32.totalorder %s25, 0
      %p109 = por %p107, %p108
      %p110 = scmp.ne.s32.totalorder %s98, %s99
      %p111 = scmp.eq.s32.totalorder %s26, 1
      %p112 = por %p110, %p111
      %p114 = scmp.ne.s32.totalorder %s99, %s113
      %p115 = scmp.eq.s32.totalorder %s26, 0
      %p116 = por %p114, %p115
      %s118 = sadd.s32 %s117, 1
      %p121 = scmp.eq.s32.totalorder %s20, 1
      %p122 = scmp.ne.s32.totalorder %s117, %s119
      %p123 = scmp.eq.s32.totalorder %s20, 0
      %p124 = por %p122, %p123
      %p125 = scmp.ne.s32.totalorder %s117, %s119
      %p126 = scmp.eq.s32.totalorder %s25, 1
      %p127 = por %p125, %p126
      %p128 = scmp.ne.s32.totalorder %s119, %s120
      %p129 = scmp.eq.s32.totalorder %s25, 0
      %p130 = por %p128, %p129
      %p131 = scmp.ne.s32.totalorder %s119, %s120
      %p132 = scmp.eq.s32.totalorder %s26, 1
      %p133 = por %p131, %p132
      %p135 = scmp.ne.s32.totalorder %s120, %s134
      %p136 = scmp.eq.s32.totalorder %s26, 0
      %p137 = por %p135, %p136
      %s139 = sadd.s32 %s138, 1
      %p142 = scmp.eq.s32.totalorder %s20, 1
      %p143 = scmp.ne.s32.totalorder %s138, %s140
      %p144 = scmp.eq.s32.totalorder %s20, 0
      %p145 = por %p143, %p144
      %p146 = scmp.ne.s32.totalorder %s138, %s140
      %p147 = scmp.eq.s32.totalorder %s25, 1
      %p148 = por %p146, %p147
      %p149 = scmp.ne.s32.totalorder %s140, %s141
      %p150 = scmp.eq.s32.totalorder %s25, 0
      %p151 = por %p149, %p150
      %p152 = scmp.ne.s32.totalorder %s140, %s141
      %p153 = scmp.eq.s32.totalorder %s26, 1
      %p154 = por %p152, %p153
      %p156 = scmp.ne.s32.totalorder %s141, %s155
      %p157 = scmp.eq.s32.totalorder %s26, 0
      %p158 = por %p156, %p157
      %s160 = sadd.s32 %s159, 1
      %p163 = scmp.eq.s32.totalorder %s20, 1
      %p164 = scmp.ne.s32.totalorder %s159, %s161
      %p165 = scmp.eq.s32.totalorder %s20, 0
      %p166 = por %p164, %p165
      %p167 = scmp.ne.s32.totalorder %s159, %s161
      %p168 = scmp.eq.s32.totalorder %s25, 1
      %p169 = por %p167, %p168
      %p170 = scmp.ne.s32.totalorder %s161, %s162
      %p171 = scmp.eq.s32.totalorder %s25, 0
      %p172 = por %p170, %p171
      %p173 = scmp.ne.s32.totalorder %s161, %s162
      %p174 = scmp.eq.s32.totalorder %s26, 1
      %p175 = por %p173, %p174
      %p177 = scmp.ne.s32.totalorder %s162, %s176
      %p178 = scmp.eq.s32.totalorder %s26, 0
      %p179 = por %p177, %p178
      %s180 = ssub.s32 %s20, %s27
      %p181 = scmp.eq.s32.totalorder %s180, 0
      %s183 = sadd.s32 %s182, 1
      %s184 = scalar_select %p181, %s182, %s183
      %p187 = pneg %p181
      %p188 = scmp.eq.s32.totalorder %s20, 1
      %p189 = por %p187, %p188
      %p190 = scmp.ne.s32.totalorder %s182, %s185
      %p191 = scmp.eq.s32.totalorder %s20, 0
      %p192 = por %p190, %p191
      %p193 = scmp.ne.s32.totalorder %s182, %s185
      %p194 = scmp.eq.s32.totalorder %s25, 1
      %p195 = por %p193, %p194
      %p196 = scmp.ne.s32.totalorder %s185, %s186
      %p197 = scmp.eq.s32.totalorder %s25, 0
      %p198 = por %p196, %p197
      %p199 = scmp.ne.s32.totalorder %s185, %s186
      %p200 = scmp.eq.s32.totalorder %s26, 1
      %p201 = por %p199, %p200
      %p203 = scmp.ne.s32.totalorder %s186, %s202
      %p204 = scmp.eq.s32.totalorder %s26, 0
      %p205 = por %p203, %p204
      %p206 = scmp.le.s32.totalorder 1, %s20
      %p207 = scmp.lt.s32.totalorder %s20, 3
      %p208 = pnand %p206, %p207
      %p209 = pneg %p208
      // Predicated region
      $region9: #{tpu_custom_call.1} parent=5 // pred_check
        _
      $region10: #{tpu_custom_call.1} parent=5 // pred_check_branch
        %211 = sbr.rel (%p208) target = $region12
      $region11: #{tpu_custom_call.1} parent=5 // pred_region
        %s212 = ssub.s32 %s20, 1
        // Predicated region
        $region13: #{tpu_custom_call.1} parent=11 // pred_check
          %p213 = pneg %p67
        $region14: #{tpu_custom_call.1} parent=11 // pred_check_branch
          %215 = sbr.rel (%p213) target = $region16
        $region15: #{tpu_custom_call.1} parent=11 // pred_region
          _
        $region16: #{tpu_custom_call.1} parent=11 // pred_fallthru
          _
        // Predicated region
        $region17: #{tpu_custom_call.1} parent=11 // pred_check
          %p216 = pneg %p88
        $region18: #{tpu_custom_call.1} parent=11 // pred_check_branch
          %218 = sbr.rel (%p216) target = $region20
        $region19: #{tpu_custom_call.1} parent=11 // pred_region
          _
        $region20: #{tpu_custom_call.1} parent=11 // pred_fallthru
          _
        // Predicated region
        $region21: #{tpu_custom_call.1} parent=11 // pred_check
          %p219 = pneg %p109
        $region22: #{tpu_custom_call.1} parent=11 // pred_check_branch
          %221 = sbr.rel (%p219) target = $region24
        $region23: #{tpu_custom_call.1} parent=11 // pred_region
          %223 = vsyncadd [#allocation7], 0
          %s224 = sshll.u32 %s3, 4
          %s225 = int_to_ptr.hbm [resolvable:$true] %s224
          %s226 = sshll.u32 [#allocation6], 4
          %s227 = int_to_ptr.vmem [resolvable:$true] %s226
          %232 = dma.hbm_to_vmem [thread:$0]  %s225, 576, %s227, [#allocation7], 64, 64, 4
        $region24: #{tpu_custom_call.1} parent=11 // pred_fallthru
          _
        // Predicated region
        $region25: #{tpu_custom_call.1} parent=11 // pred_check
          %p233 = pneg %p130
        $region26: #{tpu_custom_call.1} parent=11 // pred_check_branch
          %235 = sbr.rel (%p233) target = $region28
        $region27: #{tpu_custom_call.1} parent=11 // pred_region
          _
        $region28: #{tpu_custom_call.1} parent=11 // pred_fallthru
          _
        // Predicated region
        $region29: #{tpu_custom_call.1} parent=11 // pred_check
          %p236 = pneg %p151
        $region30: #{tpu_custom_call.1} parent=11 // pred_check_branch
          %238 = sbr.rel (%p236) target = $region32
        $region31: #{tpu_custom_call.1} parent=11 // pred_region
          _
        $region32: #{tpu_custom_call.1} parent=11 // pred_fallthru
          _
        // Predicated region
        $region33: #{tpu_custom_call.1} parent=11 // pred_check
          %p239 = pneg %p172
        $region34: #{tpu_custom_call.1} parent=11 // pred_check_branch
          %241 = sbr.rel (%p239) target = $region36
        $region35: #{tpu_custom_call.1} parent=11 // pred_region
          _
        $region36: #{tpu_custom_call.1} parent=11 // pred_fallthru
          _
      $region12: #{tpu_custom_call.1} parent=5 // pred_fallthru
        _
      %p242 = scmp.lt.s32.totalorder %s20, 2
      // Predicated region
      $region37: #{tpu_custom_call.1} parent=5 // pred_check
        %p243 = pneg %p242
      $region38: #{tpu_custom_call.1} parent=5 // pred_check_branch
        %245 = sbr.rel (%p243) target = $region40
      $region39: #{tpu_custom_call.1} parent=5 // pred_region
        // Predicated region
        $region41: #{tpu_custom_call.1} parent=39 // pred_check
          %p246 = pneg %p40
        $region42: #{tpu_custom_call.1} parent=39 // pred_check_branch
          %248 = sbr.rel (%p246) target = $region44
        $region43: #{tpu_custom_call.1} parent=39 // pred_region
          %s249 = sand.u32 %s30, 1
          %s250 = scalar_lea.sflag [#allocation4], %s249
          %s251 = sand.u32 %s30, 1
          %s252 = smul.addr %s251, 32
          %s253 = scalar_lea.vmem [#allocation3], %s252
          %255 = vsyncadd %s250, 0
          %s256 = smul.addr %s20, 4
          %s257 = smul.addr %s256, 8
          %s258 = scalar_lea.hbm %s0, %s257
          %s259 = sshll.u32 %s258, 4
          %s260 = int_to_ptr.hbm [resolvable:$true] %s259
          %s261 = sshll.u32 %s253, 4
          %s262 = int_to_ptr.vmem [resolvable:$true] %s261
          %267 = dma.hbm_to_vmem [thread:$0]  %s260, 512, %s262, %s250, 256, 256, 16
        $region44: #{tpu_custom_call.1} parent=39 // pred_fallthru
          _
      $region40: #{tpu_custom_call.1} parent=5 // pred_fallthru
        _
      %p268 = scmp.le.s32.totalorder 1, %s20
      %p269 = scmp.lt.s32.totalorder %s20, 3
      %p270 = pnand %p268, %p269
      %p271 = pneg %p270
      // Predicated region
      $region45: #{tpu_custom_call.1} parent=5 // pred_check
        _
      $region46: #{tpu_custom_call.1} parent=5 // pred_check_branch
        %273 = sbr.rel (%p270) target = $region48
      $region47: #{tpu_custom_call.1} parent=5 // pred_region
        %s274 = ssub.s32 %s20, 1
        %s275 = sand.u32 %s33, 1
        %s276 = scalar_lea.sflag [#allocation4], %s275
        %s277 = sand.u32 %s33, 1
        %s278 = smul.addr %s277, 32
        %s279 = scalar_lea.vmem [#allocation3], %s278
        // Predicated region
        $region49: #{tpu_custom_call.1} parent=47 // pred_check
          %p280 = pneg %p46
        $region50: #{tpu_custom_call.1} parent=47 // pred_check_branch
          %282 = sbr.rel (%p280) target = $region52
        $region51: #{tpu_custom_call.1} parent=47 // pred_region
          %284 = dma.done %s276, 512
        $region52: #{tpu_custom_call.1} parent=47 // pred_fallthru
          _
        // Predicated region
        $region53: #{tpu_custom_call.1} parent=47 // pred_check
          %p285 = pneg %p109
        $region54: #{tpu_custom_call.1} parent=47 // pred_check_branch
          %287 = sbr.rel (%p285) target = $region56
        $region55: #{tpu_custom_call.1} parent=47 // pred_region
          %289 = dma.done [#allocation7], 576
        $region56: #{tpu_custom_call.1} parent=47 // pred_fallthru
          _
        %s290 = sand.u32 %s33, 1
        %s291 = scalar_lea.sflag [#allocation4], %s290
        %s292 = sand.u32 %s33, 1
        %s293 = smul.addr %s292, 32
        %s294 = scalar_lea.vmem [#allocation3], %s293
        %p295 = pneg %p46
        %p296 = pneg %p43
        %p297 = pneg %p67
        %p298 = pneg %p64
        %p299 = pneg %p88
        %p300 = pneg %p85
        %p301 = pneg %p109
        %p302 = pneg %p106
        %p303 = pneg %p130
        %p304 = pneg %p127
        %p305 = pneg %p151
        %p306 = pneg %p148
        %p307 = pneg %p172
        %p308 = pneg %p169
        %p309 = pneg %p198
        %p310 = pneg %p195
        %s311 = sand.u32 %s185, 1
        %s312 = scalar_lea.sflag [#allocation5], %s311
        %s313 = sand.u32 %s185, 1
        %s314 = smul.addr %s313, 64
        %s315 = scalar_lea.vmem [#allocation8], %s314
        %v316 = vld [vmem:[%s1] sm:$0xf]
        %v317 = vld [vmem:[%s279] sm:$0xff]
        %v318 = vld [vmem:[%s279 + $0x8] sm:$0xff]
        %v319 = vld [vmem:[%s279 + $0x10] sm:$0xff]
        %v320 = vld [vmem:[%s279 + $0x18] sm:$0xff]
        %v321 = vld [vmem:[%s2] sm:$0xf]
        %323 = vset.pattern.permute.xlu0 0
        %324 = vperm.xlu0 %323, %v321
        %v325 = vpop.permute.xlu0 %324
        %vm327 = vcmask 130048
        %v329 = vsel %vm327, %v316, 0
        %331 = vmatpush.msra.mxu0 0.0
        %332 = vmatpush.msra.mxu0 0.0
        %333 = vmatpush.msra.mxu0 0.0
        %334 = vmatpush.msra.mxu0 0.0
        %335 = vmatpush.msra.mxu0 0.0
        %336 = vmatpush.msra.mxu0 0.0
        %337 = vmatpush.msra.mxu0 0.0
        %338 = vmatpush.msra.mxu0 0.0
        %339 = vmatpush.msra.mxu0 0.0
        %340 = vmatpush.msra.mxu0 0.0
        %341 = vmatpush.msra.mxu0 0.0
        %342 = vmatpush.msra.mxu0 0.0
        %343 = vmatpush.msra.mxu0 0.0
        %344 = vmatpush.msra.mxu0 0.0
        %345 = vmatpush.msra.mxu0 %v319
        %346 = vmatpush.msra.mxu0 %v317
        %347 = vmatmul.f32.gmra.mxu0 %v329
        %v348 = vpop.f32.mrf.mxu0
        %v349 = vadd.f32 %v325, %v348
        %350 = vdwg.mxu0
        %351 = vmatpush.msra.mxu0 0.0
        %352 = vmatpush.msra.mxu0 0.0
        %353 = vmatpush.msra.mxu0 0.0
        %354 = vmatpush.msra.mxu0 0.0
        %355 = vmatpush.msra.mxu0 0.0
        %356 = vmatpush.msra.mxu0 0.0
        %357 = vmatpush.msra.mxu0 0.0
        %358 = vmatpush.msra.mxu0 0.0
        %359 = vmatpush.msra.mxu0 0.0
        %360 = vmatpush.msra.mxu0 0.0
        %361 = vmatpush.msra.mxu0 0.0
        %362 = vmatpush.msra.mxu0 0.0
        %363 = vmatpush.msra.mxu0 0.0
        %364 = vmatpush.msra.mxu0 0.0
        %365 = vmatpush.msra.mxu0 %v320
        %366 = vmatpush.msra.mxu0 %v318
        %367 = vmatmul.f32.gmra.mxu0 %v329
        %v368 = vpop.f32.mrf.mxu0
        %v369 = vadd.f32 %v325, %v368
        %370 = vdwg.mxu0
        %v371 = vmax.f32 %v349, 0.0
        %v372 = vmax.f32 %v369, 0.0
        %373 = vst [vmem:[#allocation2] sm:$0xff] 0.0
        %vm374 = vcmask 134144
        %375 = vst.msk [vmem:[#allocation2 + $0x8] sm:$0xf] %vm374, 0.0
        %v378 = vrot.slane %v372, 4
        %vm379 = vcmask 1043456
        %v380 = vsel %vm379, %v371, %v378
        %382 = vst [vmem:[#allocation2] sm:$0xff] %v380
        %v383 = vlaneseq
        %v384 = vand.u32 %v383, 127
        %v385 = vadd.s32 %v384, 128
        %vm386 = vcmp.lt.s32.totalorder %v384, 0
        %v387 = vsub.s32 0, %v384
        %v388 = vsel %vm386, %v387, %v384
        %v389 = vshrl.u32 %v388, 4
        %v390 = vand.u32 %v388, 15
        %v391 = vsub.s32 0, %v390
        %v392 = vsel %vm386, %v391, %v390
        %vm393 = vcmp.lt.s32.totalorder %v385, 0
        %v394 = vsub.s32 0, %v385
        %v395 = vsel %vm393, %v394, %v385
        %v396 = vshrl.u32 %v395, 4
        %v397 = vand.u32 %v395, 15
        %v398 = vsub.s32 0, %v397
        %v399 = vsel %vm393, %v398, %v397
        %vm400 = vcmp.ne.s32.totalorder %v392, 0
        %vm401 = vcmp.ne.s32.totalorder %v399, 0
        %vm402 = vcmp.lt.s32.totalorder %v392, 0
        %vm403 = vcmp.lt.s32.totalorder %v399, 0
        %vm404 = vmand %vm402, %vm400
        %vm405 = vmand %vm403, %vm401
        %v406 = vadd.s32 %v392, 16
        %v407 = vadd.s32 %v399, 16
        %v408 = vsel %vm404, %v406, %v392
        %v409 = vsel %vm405, %v407, %v399
        %vm410 = vcmp.lt.s32.totalorder %v408, 15
        %vm411 = vcmp.lt.s32.totalorder %v409, 15
        %v412 = vld [vmem:[#allocation2] sm:$0xff]
        %v413 = vld [vmem:[#allocation2 + $0x8] sm:$0xf]
        %416 = vst [vmem:[#allocation1] ss:$2 sm:$0xff] %v412
        %s417 = scalar_lea.vmem [#allocation1], 16
        %418 = vst [vmem:[%s417] ss:$2 sm:$0xff] %v413
        %v419 = vld.sshfl [vmem:[#allocation1] sm:$0xff pattern:$0x75316420]
        %v420 = vld.sshfl [vmem:[#allocation1 + $0x8] sm:$0xff pattern:$0x75316420]
        %v421 = vld.sshfl [vmem:[#allocation1 + $0x10] sm:$0xff pattern:$0x75316420]
        %422 = vrot.lane.b32.xlu0 %v419, 127
        %v423 = vpop.permute.xlu0 %422
        %424 = vrot.lane.b32.xlu0 %v420, 127
        %v425 = vpop.permute.xlu0 %424
        %426 = vrot.lane.b32.xlu0 %v421, 127
        %v427 = vpop.permute.xlu0 %426
        %vm428 = vcmask 1039360
        %v429 = vsel %vm428, %v423, %v425
        %v430 = vsel %vm428, %v425, %v427
        %v433 = vsel %vm410, %v429, 0.0
        %v434 = vsel %vm411, %v430, 0.0
        %v435 = vld [vmem:[#allocation2] sm:$0xff]
        %v436 = vld [vmem:[#allocation2 + $0x8] sm:$0xf]
        %439 = vst [vmem:[#allocation1] ss:$2 sm:$0xff] %v435
        %s440 = scalar_lea.vmem [#allocation1], 16
        %441 = vst [vmem:[%s440] ss:$2 sm:$0xff] %v436
        %v442 = vld.sshfl [vmem:[#allocation1] sm:$0xff pattern:$0x75316420]
        %v443 = vld.sshfl [vmem:[#allocation1 + $0x8] sm:$0xff pattern:$0x75316420]
        %v444 = vld.sshfl [vmem:[#allocation1 + $0x10] sm:$0xff pattern:$0x75316420]
        %445 = vrot.lane.b32.xlu0 %v442, 111
        %v446 = vpop.permute.xlu0 %445
        %447 = vrot.lane.b32.xlu0 %v443, 111
        %v448 = vpop.permute.xlu0 %447
        %449 = vrot.lane.b32.xlu0 %v444, 111
        %v450 = vpop.permute.xlu0 %449
        %vm451 = vcmask 908288
        %v452 = vsel %vm451, %v446, %v448
        %v453 = vsel %vm451, %v448, %v450
        %v456 = vsel %vm410, %v452, 0.0
        %v457 = vsel %vm411, %v453, 0.0
        %v458 = vld [vmem:[%s4] sm:$0xf]
        %s459 = scalar_lea.vmem [#allocation6], 16
        %v460 = vld [vmem:[%s459] sm:$0xf]
        %462 = vset.pattern.permute.xlu0 0
        %463 = vperm.xlu0 %462, %v458
        %v464 = vpop.permute.xlu0 %463
        %vm466 = vcmask 31744
        %v468 = vsel %vm466, %v460, 0
        %v470 = vsel %vm379, %v371, 0
        %v472 = vsel %vm379, %v372, 0
        %474 = vmatpush.msra.mxu0 0.0
        %475 = vmatpush.msra.mxu0 0.0
        %476 = vmatpush.msra.mxu0 0.0
        %477 = vmatpush.msra.mxu0 0.0
        %478 = vmatpush.msra.mxu0 0.0
        %479 = vmatpush.msra.mxu0 0.0
        %480 = vmatpush.msra.mxu0 0.0
        %481 = vmatpush.msra.mxu0 0.0
        %482 = vmatpush.msra.mxu0 0.0
        %483 = vmatpush.msra.mxu0 0.0
        %484 = vmatpush.msra.mxu0 0.0
        %485 = vmatpush.msra.mxu0 0.0
        %486 = vmatpush.msra.mxu0 0.0
        %487 = vmatpush.msra.mxu0 0.0
        %488 = vmatpush.msra.mxu0 0.0
        %489 = vmatpush.msra.mxu0 %v470
        %490 = vmatmul.f32.gmra.mxu0 %v468
        %v491 = vpop.f32.mrf.mxu0
        %v492 = vadd.f32 %v464, %v491
        %493 = vdwg.mxu0
        %494 = vmatpush.msra.mxu0 0.0
        %495 = vmatpush.msra.mxu0 0.0
        %496 = vmatpush.msra.mxu0 0.0
        %497 = vmatpush.msra.mxu0 0.0
        %498 = vmatpush.msra.mxu0 0.0
        %499 = vmatpush.msra.mxu0 0.0
        %500 = vmatpush.msra.mxu0 0.0
        %501 = vmatpush.msra.mxu0 0.0
        %502 = vmatpush.msra.mxu0 0.0
        %503 = vmatpush.msra.mxu0 0.0
        %504 = vmatpush.msra.mxu0 0.0
        %505 = vmatpush.msra.mxu0 0.0
        %506 = vmatpush.msra.mxu0 0.0
        %507 = vmatpush.msra.mxu0 0.0
        %508 = vmatpush.msra.mxu0 0.0
        %509 = vmatpush.msra.mxu0 %v472
        %510 = vmatmul.f32.gmra.mxu0 %v468
        %v511 = vpop.f32.mrf.mxu0
        %v512 = vadd.f32 %v464, %v511
        %513 = vdwg.mxu0
        %s514 = scalar_lea.vmem [#allocation6], 20
        %v515 = vld [vmem:[%s514] sm:$0xf]
        %s516 = scalar_lea.vmem [#allocation6], 12
        %v517 = vld [vmem:[%s516] sm:$0xf]
        %v519 = vsel %vm466, %v517, 0
        %v522 = vsel %vm379, %v433, 0
        %v525 = vsel %vm379, %v434, 0
        %527 = vmatpush.msra.mxu0 0.0
        %528 = vmatpush.msra.mxu0 0.0
        %529 = vmatpush.msra.mxu0 0.0
        %530 = vmatpush.msra.mxu0 0.0
        %531 = vmatpush.msra.mxu0 0.0
        %532 = vmatpush.msra.mxu0 0.0
        %533 = vmatpush.msra.mxu0 0.0
        %534 = vmatpush.msra.mxu0 0.0
        %535 = vmatpush.msra.mxu0 0.0
        %536 = vmatpush.msra.mxu0 0.0
        %537 = vmatpush.msra.mxu0 0.0
        %538 = vmatpush.msra.mxu0 0.0
        %539 = vmatpush.msra.mxu0 0.0
        %540 = vmatpush.msra.mxu0 0.0
        %541 = vmatpush.msra.mxu0 0.0
        %542 = vmatpush.msra.mxu0 %v522
        %543 = vmatmul.f32.gmra.mxu0 %v519
        %v544 = vpop.f32.mrf.mxu0
        %v545 = vadd.f32 0.0, %v544
        %546 = vdwg.mxu0
        %547 = vmatpush.msra.mxu0 0.0
        %548 = vmatpush.msra.mxu0 0.0
        %549 = vmatpush.msra.mxu0 0.0
        %550 = vmatpush.msra.mxu0 0.0
        %551 = vmatpush.msra.mxu0 0.0
        %552 = vmatpush.msra.mxu0 0.0
        %553 = vmatpush.msra.mxu0 0.0
        %554 = vmatpush.msra.mxu0 0.0
        %555 = vmatpush.msra.mxu0 0.0
        %556 = vmatpush.msra.mxu0 0.0
        %557 = vmatpush.msra.mxu0 0.0
        %558 = vmatpush.msra.mxu0 0.0
        %559 = vmatpush.msra.mxu0 0.0
        %560 = vmatpush.msra.mxu0 0.0
        %561 = vmatpush.msra.mxu0 0.0
        %562 = vmatpush.msra.mxu0 %v525
        %563 = vmatmul.f32.gmra.mxu0 %v519
        %v564 = vpop.f32.mrf.mxu0
        %v565 = vadd.f32 0.0, %v564
        %566 = vdwg.mxu0
        %v568 = vsel %vm466, %v515, 0
        %570 = vmatpush.msra.mxu0 0.0
        %571 = vmatpush.msra.mxu0 0.0
        %572 = vmatpush.msra.mxu0 0.0
        %573 = vmatpush.msra.mxu0 0.0
        %574 = vmatpush.msra.mxu0 0.0
        %575 = vmatpush.msra.mxu0 0.0
        %576 = vmatpush.msra.mxu0 0.0
        %577 = vmatpush.msra.mxu0 0.0
        %578 = vmatpush.msra.mxu0 0.0
        %579 = vmatpush.msra.mxu0 0.0
        %580 = vmatpush.msra.mxu0 0.0
        %581 = vmatpush.msra.mxu0 0.0
        %582 = vmatpush.msra.mxu0 0.0
        %583 = vmatpush.msra.mxu0 0.0
        %584 = vmatpush.msra.mxu0 0.0
        %585 = vmatpush.msra.mxu0 %v470
        %586 = vmatmul.f32.gmra.mxu0 %v568
        %v587 = vpop.f32.mrf.mxu0
        %v588 = vadd.f32 %v545, %v587
        %589 = vdwg.mxu0
        %590 = vmatpush.msra.mxu0 0.0
        %591 = vmatpush.msra.mxu0 0.0
        %592 = vmatpush.msra.mxu0 0.0
        %593 = vmatpush.msra.mxu0 0.0
        %594 = vmatpush.msra.mxu0 0.0
        %595 = vmatpush.msra.mxu0 0.0
        %596 = vmatpush.msra.mxu0 0.0
        %597 = vmatpush.msra.mxu0 0.0
        %598 = vmatpush.msra.mxu0 0.0
        %599 = vmatpush.msra.mxu0 0.0
        %600 = vmatpush.msra.mxu0 0.0
        %601 = vmatpush.msra.mxu0 0.0
        %602 = vmatpush.msra.mxu0 0.0
        %603 = vmatpush.msra.mxu0 0.0
        %604 = vmatpush.msra.mxu0 0.0
        %605 = vmatpush.msra.mxu0 %v472
        %606 = vmatmul.f32.gmra.mxu0 %v568
        %v607 = vpop.f32.mrf.mxu0
        %v608 = vadd.f32 %v565, %v607
        %609 = vdwg.mxu0
        %v610 = vadd.f32 %v588, %v464
        %v611 = vadd.f32 %v608, %v464
        %s612 = scalar_lea.vmem [#allocation6], 28
        %v613 = vld [vmem:[%s612] sm:$0xf]
        %s614 = scalar_lea.vmem [#allocation6], 4
        %v615 = vld [vmem:[%s614] sm:$0xf]
        %616 = vst [vmem:[#allocation1] ss:$2 sm:$0xff] %v435
        %s617 = scalar_lea.vmem [#allocation1], 16
        %618 = vst [vmem:[%s617] ss:$2 sm:$0xff] %v436
        %v619 = vld.sshfl [vmem:[#allocation1] sm:$0xff pattern:$0x75316420]
        %v620 = vld.sshfl [vmem:[#allocation1 + $0x8] sm:$0xff pattern:$0x75316420]
        %v621 = vld.sshfl [vmem:[#allocation1 + $0x10] sm:$0xff pattern:$0x75316420]
        %622 = vrot.lane.b32.xlu0 %v619, 112
        %v623 = vpop.permute.xlu0 %622
        %624 = vrot.lane.b32.xlu0 %v620, 112
        %v625 = vpop.permute.xlu0 %624
        %626 = vrot.lane.b32.xlu0 %v621, 112
        %v627 = vpop.permute.xlu0 %626
        %vm628 = vcmask 916480
        %v629 = vsel %vm628, %v623, %v625
        %v630 = vsel %vm628, %v625, %v627
        %v632 = vsel %vm466, %v615, 0
        %v634 = vsel %vm379, %v629, 0
        %v636 = vsel %vm379, %v630, 0
        %638 = vmatpush.msra.mxu0 0.0
        %639 = vmatpush.msra.mxu0 0.0
        %640 = vmatpush.msra.mxu0 0.0
        %641 = vmatpush.msra.mxu0 0.0
        %642 = vmatpush.msra.mxu0 0.0
        %643 = vmatpush.msra.mxu0 0.0
        %644 = vmatpush.msra.mxu0 0.0
        %645 = vmatpush.msra.mxu0 0.0
        %646 = vmatpush.msra.mxu0 0.0
        %647 = vmatpush.msra.mxu0 0.0
        %648 = vmatpush.msra.mxu0 0.0
        %649 = vmatpush.msra.mxu0 0.0
        %650 = vmatpush.msra.mxu0 0.0
        %651 = vmatpush.msra.mxu0 0.0
        %652 = vmatpush.msra.mxu0 0.0
        %653 = vmatpush.msra.mxu0 %v634
        %654 = vmatmul.f32.gmra.mxu0 %v632
        %v655 = vpop.f32.mrf.mxu0
        %v656 = vadd.f32 0.0, %v655
        %657 = vdwg.mxu0
        %658 = vmatpush.msra.mxu0 0.0
        %659 = vmatpush.msra.mxu0 0.0
        %660 = vmatpush.msra.mxu0 0.0
        %661 = vmatpush.msra.mxu0 0.0
        %662 = vmatpush.msra.mxu0 0.0
        %663 = vmatpush.msra.mxu0 0.0
        %664 = vmatpush.msra.mxu0 0.0
        %665 = vmatpush.msra.mxu0 0.0
        %666 = vmatpush.msra.mxu0 0.0
        %667 = vmatpush.msra.mxu0 0.0
        %668 = vmatpush.msra.mxu0 0.0
        %669 = vmatpush.msra.mxu0 0.0
        %670 = vmatpush.msra.mxu0 0.0
        %671 = vmatpush.msra.mxu0 0.0
        %672 = vmatpush.msra.mxu0 0.0
        %673 = vmatpush.msra.mxu0 %v636
        %674 = vmatmul.f32.gmra.mxu0 %v632
        %v675 = vpop.f32.mrf.mxu0
        %v676 = vadd.f32 0.0, %v675
        %677 = vdwg.mxu0
        %v679 = vsel %vm466, %v613, 0
        %681 = vmatpush.msra.mxu0 0.0
        %682 = vmatpush.msra.mxu0 0.0
        %683 = vmatpush.msra.mxu0 0.0
        %684 = vmatpush.msra.mxu0 0.0
        %685 = vmatpush.msra.mxu0 0.0
        %686 = vmatpush.msra.mxu0 0.0
        %687 = vmatpush.msra.mxu0 0.0
        %688 = vmatpush.msra.mxu0 0.0
        %689 = vmatpush.msra.mxu0 0.0
        %690 = vmatpush.msra.mxu0 0.0
        %691 = vmatpush.msra.mxu0 0.0
        %692 = vmatpush.msra.mxu0 0.0
        %693 = vmatpush.msra.mxu0 0.0
        %694 = vmatpush.msra.mxu0 0.0
        %695 = vmatpush.msra.mxu0 0.0
        %696 = vmatpush.msra.mxu0 %v470
        %697 = vmatmul.f32.gmra.mxu0 %v679
        %v698 = vpop.f32.mrf.mxu0
        %v699 = vadd.f32 %v656, %v698
        %700 = vdwg.mxu0
        %701 = vmatpush.msra.mxu0 0.0
        %702 = vmatpush.msra.mxu0 0.0
        %703 = vmatpush.msra.mxu0 0.0
        %704 = vmatpush.msra.mxu0 0.0
        %705 = vmatpush.msra.mxu0 0.0
        %706 = vmatpush.msra.mxu0 0.0
        %707 = vmatpush.msra.mxu0 0.0
        %708 = vmatpush.msra.mxu0 0.0
        %709 = vmatpush.msra.mxu0 0.0
        %710 = vmatpush.msra.mxu0 0.0
        %711 = vmatpush.msra.mxu0 0.0
        %712 = vmatpush.msra.mxu0 0.0
        %713 = vmatpush.msra.mxu0 0.0
        %714 = vmatpush.msra.mxu0 0.0
        %715 = vmatpush.msra.mxu0 0.0
        %716 = vmatpush.msra.mxu0 %v472
        %717 = vmatmul.f32.gmra.mxu0 %v679
        %v718 = vpop.f32.mrf.mxu0
        %v719 = vadd.f32 %v676, %v718
        %720 = vdwg.mxu0
        %v721 = vadd.f32 %v699, %v464
        %v722 = vadd.f32 %v719, %v464
        %s723 = scalar_lea.vmem [#allocation6], 32
        %v724 = vld [vmem:[%s723] sm:$0xf]
        %s725 = scalar_lea.vmem [#allocation6], 24
        %v726 = vld [vmem:[%s725] sm:$0xf]
        %v728 = vsel %vm466, %v726, 0
        %730 = vmatpush.msra.mxu0 0.0
        %731 = vmatpush.msra.mxu0 0.0
        %732 = vmatpush.msra.mxu0 0.0
        %733 = vmatpush.msra.mxu0 0.0
        %734 = vmatpush.msra.mxu0 0.0
        %735 = vmatpush.msra.mxu0 0.0
        %736 = vmatpush.msra.mxu0 0.0
        %737 = vmatpush.msra.mxu0 0.0
        %738 = vmatpush.msra.mxu0 0.0
        %739 = vmatpush.msra.mxu0 0.0
        %740 = vmatpush.msra.mxu0 0.0
        %741 = vmatpush.msra.mxu0 0.0
        %742 = vmatpush.msra.mxu0 0.0
        %743 = vmatpush.msra.mxu0 0.0
        %744 = vmatpush.msra.mxu0 0.0
        %745 = vmatpush.msra.mxu0 %v522
        %746 = vmatmul.f32.gmra.mxu0 %v728
        %v747 = vpop.f32.mrf.mxu0
        %v748 = vadd.f32 0.0, %v747
        %749 = vdwg.mxu0
        %750 = vmatpush.msra.mxu0 0.0
        %751 = vmatpush.msra.mxu0 0.0
        %752 = vmatpush.msra.mxu0 0.0
        %753 = vmatpush.msra.mxu0 0.0
        %754 = vmatpush.msra.mxu0 0.0
        %755 = vmatpush.msra.mxu0 0.0
        %756 = vmatpush.msra.mxu0 0.0
        %757 = vmatpush.msra.mxu0 0.0
        %758 = vmatpush.msra.mxu0 0.0
        %759 = vmatpush.msra.mxu0 0.0
        %760 = vmatpush.msra.mxu0 0.0
        %761 = vmatpush.msra.mxu0 0.0
        %762 = vmatpush.msra.mxu0 0.0
        %763 = vmatpush.msra.mxu0 0.0
        %764 = vmatpush.msra.mxu0 0.0
        %765 = vmatpush.msra.mxu0 %v525
        %766 = vmatmul.f32.gmra.mxu0 %v728
        %v767 = vpop.f32.mrf.mxu0
        %v768 = vadd.f32 0.0, %v767
        %769 = vdwg.mxu0
        %v771 = vsel %vm466, %v724, 0
        %773 = vmatpush.msra.mxu0 0.0
        %774 = vmatpush.msra.mxu0 0.0
        %775 = vmatpush.msra.mxu0 0.0
        %776 = vmatpush.msra.mxu0 0.0
        %777 = vmatpush.msra.mxu0 0.0
        %778 = vmatpush.msra.mxu0 0.0
        %779 = vmatpush.msra.mxu0 0.0
        %780 = vmatpush.msra.mxu0 0.0
        %781 = vmatpush.msra.mxu0 0.0
        %782 = vmatpush.msra.mxu0 0.0
        %783 = vmatpush.msra.mxu0 0.0
        %784 = vmatpush.msra.mxu0 0.0
        %785 = vmatpush.msra.mxu0 0.0
        %786 = vmatpush.msra.mxu0 0.0
        %787 = vmatpush.msra.mxu0 0.0
        %788 = vmatpush.msra.mxu0 %v470
        %789 = vmatmul.f32.gmra.mxu0 %v771
        %v790 = vpop.f32.mrf.mxu0
        %v791 = vadd.f32 %v748, %v790
        %792 = vdwg.mxu0
        %793 = vmatpush.msra.mxu0 0.0
        %794 = vmatpush.msra.mxu0 0.0
        %795 = vmatpush.msra.mxu0 0.0
        %796 = vmatpush.msra.mxu0 0.0
        %797 = vmatpush.msra.mxu0 0.0
        %798 = vmatpush.msra.mxu0 0.0
        %799 = vmatpush.msra.mxu0 0.0
        %800 = vmatpush.msra.mxu0 0.0
        %801 = vmatpush.msra.mxu0 0.0
        %802 = vmatpush.msra.mxu0 0.0
        %803 = vmatpush.msra.mxu0 0.0
        %804 = vmatpush.msra.mxu0 0.0
        %805 = vmatpush.msra.mxu0 0.0
        %806 = vmatpush.msra.mxu0 0.0
        %807 = vmatpush.msra.mxu0 0.0
        %808 = vmatpush.msra.mxu0 %v472
        %809 = vmatmul.f32.gmra.mxu0 %v771
        %v810 = vpop.f32.mrf.mxu0
        %v811 = vadd.f32 %v768, %v810
        %812 = vdwg.mxu0
        %s813 = scalar_lea.vmem [#allocation6], 8
        %v814 = vld [vmem:[%s813] sm:$0xf]
        %815 = vst [vmem:[#allocation1] ss:$2 sm:$0xff] %v435
        %s816 = scalar_lea.vmem [#allocation1], 16
        %817 = vst [vmem:[%s816] ss:$2 sm:$0xff] %v436
        %v818 = vld.sshfl [vmem:[#allocation1] sm:$0xff pattern:$0x75316420]
        %v819 = vld.sshfl [vmem:[#allocation1 + $0x8] sm:$0xff pattern:$0x75316420]
        %v820 = vld.sshfl [vmem:[#allocation1 + $0x10] sm:$0xff pattern:$0x75316420]
        %821 = vrot.lane.b32.xlu0 %v818, 112
        %v822 = vpop.permute.xlu0 %821
        %823 = vrot.lane.b32.xlu0 %v819, 112
        %v824 = vpop.permute.xlu0 %823
        %825 = vrot.lane.b32.xlu0 %v820, 112
        %v826 = vpop.permute.xlu0 %825
        %v827 = vsel %vm628, %v822, %v824
        %v828 = vsel %vm628, %v824, %v826
        %v830 = vsel %vm466, %v814, 0
        %v832 = vsel %vm379, %v827, 0
        %v834 = vsel %vm379, %v828, 0
        %836 = vmatpush.msra.mxu0 0.0
        %837 = vmatpush.msra.mxu0 0.0
        %838 = vmatpush.msra.mxu0 0.0
        %839 = vmatpush.msra.mxu0 0.0
        %840 = vmatpush.msra.mxu0 0.0
        %841 = vmatpush.msra.mxu0 0.0
        %842 = vmatpush.msra.mxu0 0.0
        %843 = vmatpush.msra.mxu0 0.0
        %844 = vmatpush.msra.mxu0 0.0
        %845 = vmatpush.msra.mxu0 0.0
        %846 = vmatpush.msra.mxu0 0.0
        %847 = vmatpush.msra.mxu0 0.0
        %848 = vmatpush.msra.mxu0 0.0
        %849 = vmatpush.msra.mxu0 0.0
        %850 = vmatpush.msra.mxu0 0.0
        %851 = vmatpush.msra.mxu0 %v832
        %852 = vmatmul.f32.gmra.mxu0 %v830
        %v853 = vpop.f32.mrf.mxu0
        %v854 = vadd.f32 0.0, %v853
        %855 = vdwg.mxu0
        %856 = vmatpush.msra.mxu0 0.0
        %857 = vmatpush.msra.mxu0 0.0
        %858 = vmatpush.msra.mxu0 0.0
        %859 = vmatpush.msra.mxu0 0.0
        %860 = vmatpush.msra.mxu0 0.0
        %861 = vmatpush.msra.mxu0 0.0
        %862 = vmatpush.msra.mxu0 0.0
        %863 = vmatpush.msra.mxu0 0.0
        %864 = vmatpush.msra.mxu0 0.0
        %865 = vmatpush.msra.mxu0 0.0
        %866 = vmatpush.msra.mxu0 0.0
        %867 = vmatpush.msra.mxu0 0.0
        %868 = vmatpush.msra.mxu0 0.0
        %869 = vmatpush.msra.mxu0 0.0
        %870 = vmatpush.msra.mxu0 0.0
        %871 = vmatpush.msra.mxu0 %v834
        %872 = vmatmul.f32.gmra.mxu0 %v830
        %v873 = vpop.f32.mrf.mxu0
        %v874 = vadd.f32 0.0, %v873
        %875 = vdwg.mxu0
        %v876 = vadd.f32 %v791, %v854
        %v877 = vadd.f32 %v811, %v874
        %v878 = vld [vmem:[#allocation6] sm:$0xf]
        %v880 = vsel %vm466, %v878, 0
        %v883 = vsel %vm379, %v456, 0
        %v886 = vsel %vm379, %v457, 0
        %888 = vmatpush.msra.mxu0 0.0
        %889 = vmatpush.msra.mxu0 0.0
        %890 = vmatpush.msra.mxu0 0.0
        %891 = vmatpush.msra.mxu0 0.0
        %892 = vmatpush.msra.mxu0 0.0
        %893 = vmatpush.msra.mxu0 0.0
        %894 = vmatpush.msra.mxu0 0.0
        %895 = vmatpush.msra.mxu0 0.0
        %896 = vmatpush.msra.mxu0 0.0
        %897 = vmatpush.msra.mxu0 0.0
        %898 = vmatpush.msra.mxu0 0.0
        %899 = vmatpush.msra.mxu0 0.0
        %900 = vmatpush.msra.mxu0 0.0
        %901 = vmatpush.msra.mxu0 0.0
        %902 = vmatpush.msra.mxu0 0.0
        %903 = vmatpush.msra.mxu0 %v883
        %904 = vmatmul.f32.gmra.mxu0 %v880
        %v905 = vpop.f32.mrf.mxu0
        %v906 = vadd.f32 0.0, %v905
        %907 = vdwg.mxu0
        %908 = vmatpush.msra.mxu0 0.0
        %909 = vmatpush.msra.mxu0 0.0
        %910 = vmatpush.msra.mxu0 0.0
        %911 = vmatpush.msra.mxu0 0.0
        %912 = vmatpush.msra.mxu0 0.0
        %913 = vmatpush.msra.mxu0 0.0
        %914 = vmatpush.msra.mxu0 0.0
        %915 = vmatpush.msra.mxu0 0.0
        %916 = vmatpush.msra.mxu0 0.0
        %917 = vmatpush.msra.mxu0 0.0
        %918 = vmatpush.msra.mxu0 0.0
        %919 = vmatpush.msra.mxu0 0.0
        %920 = vmatpush.msra.mxu0 0.0
        %921 = vmatpush.msra.mxu0 0.0
        %922 = vmatpush.msra.mxu0 0.0
        %923 = vmatpush.msra.mxu0 %v886
        %924 = vmatmul.f32.gmra.mxu0 %v880
        %v925 = vpop.f32.mrf.mxu0
        %v926 = vadd.f32 0.0, %v925
        %927 = vdwg.mxu0
        %v928 = vadd.f32 %v876, %v906
        %v929 = vadd.f32 %v877, %v926
        %v930 = vadd.f32 %v928, %v464
        %v931 = vadd.f32 %v929, %v464
        %v932 = vld [vmem:[%s5] sm:$0xff]
        %v933 = vld [vmem:[%s6] sm:$0xff]
        %v934 = vmax.f32 %v492, 0.0
        %v935 = vmax.f32 %v512, 0.0
        %937 = vset.pattern.permute.xlu0 0
        %938 = vperm.xlu0 %937, %v933
        %v939 = vpop.permute.xlu0 %938
        %v942 = vsel %vm466, %v932, 0
        %v945 = vsel %vm379, %v934, 0
        %v948 = vsel %vm379, %v935, 0
        %950 = vmatpush.msra.mxu0 0.0
        %951 = vmatpush.msra.mxu0 0.0
        %952 = vmatpush.msra.mxu0 0.0
        %953 = vmatpush.msra.mxu0 0.0
        %954 = vmatpush.msra.mxu0 0.0
        %955 = vmatpush.msra.mxu0 0.0
        %956 = vmatpush.msra.mxu0 0.0
        %957 = vmatpush.msra.mxu0 0.0
        %958 = vmatpush.msra.mxu0 0.0
        %959 = vmatpush.msra.mxu0 0.0
        %960 = vmatpush.msra.mxu0 0.0
        %961 = vmatpush.msra.mxu0 0.0
        %962 = vmatpush.msra.mxu0 0.0
        %963 = vmatpush.msra.mxu0 0.0
        %964 = vmatpush.msra.mxu0 0.0
        %965 = vmatpush.msra.mxu0 %v945
        %966 = vmatmul.f32.gmra.mxu0 %v942
        %v967 = vpop.f32.mrf.mxu0
        %v968 = vadd.f32 %v939, %v967
        %969 = vdwg.mxu0
        %970 = vmatpush.msra.mxu0 0.0
        %971 = vmatpush.msra.mxu0 0.0
        %972 = vmatpush.msra.mxu0 0.0
        %973 = vmatpush.msra.mxu0 0.0
        %974 = vmatpush.msra.mxu0 0.0
        %975 = vmatpush.msra.mxu0 0.0
        %976 = vmatpush.msra.mxu0 0.0
        %977 = vmatpush.msra.mxu0 0.0
        %978 = vmatpush.msra.mxu0 0.0
        %979 = vmatpush.msra.mxu0 0.0
        %980 = vmatpush.msra.mxu0 0.0
        %981 = vmatpush.msra.mxu0 0.0
        %982 = vmatpush.msra.mxu0 0.0
        %983 = vmatpush.msra.mxu0 0.0
        %984 = vmatpush.msra.mxu0 0.0
        %985 = vmatpush.msra.mxu0 %v948
        %986 = vmatmul.f32.gmra.mxu0 %v942
        %v987 = vpop.f32.mrf.mxu0
        %v988 = vadd.f32 %v939, %v987
        %989 = vdwg.mxu0
        %v990 = vmax.f32 %v968, 0.0
        %v991 = vmax.f32 %v988, 0.0
        %992 = vst [vmem:[%s315] sm:$0xff] %v990
        %993 = vst [vmem:[%s315 + $0x8] sm:$0xff] %v991
        %v994 = vmax.f32 %v610, 0.0
        %v995 = vmax.f32 %v611, 0.0
        %v997 = vsel %vm379, %v994, 0
        %v1000 = vsel %vm379, %v995, 0
        %1002 = vmatpush.msra.mxu0 0.0
        %1003 = vmatpush.msra.mxu0 0.0
        %1004 = vmatpush.msra.mxu0 0.0
        %1005 = vmatpush.msra.mxu0 0.0
        %1006 = vmatpush.msra.mxu0 0.0
        %1007 = vmatpush.msra.mxu0 0.0
        %1008 = vmatpush.msra.mxu0 0.0
        %1009 = vmatpush.msra.mxu0 0.0
        %1010 = vmatpush.msra.mxu0 0.0
        %1011 = vmatpush.msra.mxu0 0.0
        %1012 = vmatpush.msra.mxu0 0.0
        %1013 = vmatpush.msra.mxu0 0.0
        %1014 = vmatpush.msra.mxu0 0.0
        %1015 = vmatpush.msra.mxu0 0.0
        %1016 = vmatpush.msra.mxu0 0.0
        %1017 = vmatpush.msra.mxu0 %v997
        %1018 = vmatmul.f32.gmra.mxu0 %v942
        %v1019 = vpop.f32.mrf.mxu0
        %v1020 = vadd.f32 %v939, %v1019
        %1021 = vdwg.mxu0
        %1022 = vmatpush.msra.mxu0 0.0
        %1023 = vmatpush.msra.mxu0 0.0
        %1024 = vmatpush.msra.mxu0 0.0
        %1025 = vmatpush.msra.mxu0 0.0
        %1026 = vmatpush.msra.mxu0 0.0
        %1027 = vmatpush.msra.mxu0 0.0
        %1028 = vmatpush.msra.mxu0 0.0
        %1029 = vmatpush.msra.mxu0 0.0
        %1030 = vmatpush.msra.mxu0 0.0
        %1031 = vmatpush.msra.mxu0 0.0
        %1032 = vmatpush.msra.mxu0 0.0
        %1033 = vmatpush.msra.mxu0 0.0
        %1034 = vmatpush.msra.mxu0 0.0
        %1035 = vmatpush.msra.mxu0 0.0
        %1036 = vmatpush.msra.mxu0 0.0
        %1037 = vmatpush.msra.mxu0 %v1000
        %1038 = vmatmul.f32.gmra.mxu0 %v942
        %v1039 = vpop.f32.mrf.mxu0
        %v1040 = vadd.f32 %v939, %v1039
        %1041 = vdwg.mxu0
        %v1042 = vmax.f32 %v1020, 0.0
        %v1043 = vmax.f32 %v1040, 0.0
        %s1044 = scalar_lea.vmem %s315, 16 [#allocation8]
        %1045 = vst [vmem:[%s1044] sm:$0xff] %v1042
        %1046 = vst [vmem:[%s1044 + $0x8] sm:$0xff] %v1043
        %v1047 = vmax.f32 %v721, 0.0
        %v1048 = vmax.f32 %v722, 0.0
        %v1050 = vsel %vm379, %v1047, 0
        %v1053 = vsel %vm379, %v1048, 0
        %1055 = vmatpush.msra.mxu0 0.0
        %1056 = vmatpush.msra.mxu0 0.0
        %1057 = vmatpush.msra.mxu0 0.0
        %1058 = vmatpush.msra.mxu0 0.0
        %1059 = vmatpush.msra.mxu0 0.0
        %1060 = vmatpush.msra.mxu0 0.0
        %1061 = vmatpush.msra.mxu0 0.0
        %1062 = vmatpush.msra.mxu0 0.0
        %1063 = vmatpush.msra.mxu0 0.0
        %1064 = vmatpush.msra.mxu0 0.0
        %1065 = vmatpush.msra.mxu0 0.0
        %1066 = vmatpush.msra.mxu0 0.0
        %1067 = vmatpush.msra.mxu0 0.0
        %1068 = vmatpush.msra.mxu0 0.0
        %1069 = vmatpush.msra.mxu0 0.0
        %1070 = vmatpush.msra.mxu0 %v1050
        %1071 = vmatmul.f32.gmra.mxu0 %v942
        %v1072 = vpop.f32.mrf.mxu0
        %v1073 = vadd.f32 %v939, %v1072
        %1074 = vdwg.mxu0
        %1075 = vmatpush.msra.mxu0 0.0
        %1076 = vmatpush.msra.mxu0 0.0
        %1077 = vmatpush.msra.mxu0 0.0
        %1078 = vmatpush.msra.mxu0 0.0
        %1079 = vmatpush.msra.mxu0 0.0
        %1080 = vmatpush.msra.mxu0 0.0
        %1081 = vmatpush.msra.mxu0 0.0
        %1082 = vmatpush.msra.mxu0 0.0
        %1083 = vmatpush.msra.mxu0 0.0
        %1084 = vmatpush.msra.mxu0 0.0
        %1085 = vmatpush.msra.mxu0 0.0
        %1086 = vmatpush.msra.mxu0 0.0
        %1087 = vmatpush.msra.mxu0 0.0
        %1088 = vmatpush.msra.mxu0 0.0
        %1089 = vmatpush.msra.mxu0 0.0
        %1090 = vmatpush.msra.mxu0 %v1053
        %1091 = vmatmul.f32.gmra.mxu0 %v942
        %v1092 = vpop.f32.mrf.mxu0
        %v1093 = vadd.f32 %v939, %v1092
        %1094 = vdwg.mxu0
        %v1095 = vmax.f32 %v1073, 0.0
        %v1096 = vmax.f32 %v1093, 0.0
        %s1097 = scalar_lea.vmem %s315, 32 [#allocation8]
        %1098 = vst [vmem:[%s1097] sm:$0xff] %v1095
        %1099 = vst [vmem:[%s1097 + $0x8] sm:$0xff] %v1096
        %v1100 = vmax.f32 %v930, 0.0
        %v1101 = vmax.f32 %v931, 0.0
        %v1103 = vsel %vm379, %v1100, 0
        %v1106 = vsel %vm379, %v1101, 0
        %1108 = vmatpush.msra.mxu0 0.0
        %1109 = vmatpush.msra.mxu0 0.0
        %1110 = vmatpush.msra.mxu0 0.0
        %1111 = vmatpush.msra.mxu0 0.0
        %1112 = vmatpush.msra.mxu0 0.0
        %1113 = vmatpush.msra.mxu0 0.0
        %1114 = vmatpush.msra.mxu0 0.0
        %1115 = vmatpush.msra.mxu0 0.0
        %1116 = vmatpush.msra.mxu0 0.0
        %1117 = vmatpush.msra.mxu0 0.0
        %1118 = vmatpush.msra.mxu0 0.0
        %1119 = vmatpush.msra.mxu0 0.0
        %1120 = vmatpush.msra.mxu0 0.0
        %1121 = vmatpush.msra.mxu0 0.0
        %1122 = vmatpush.msra.mxu0 0.0
        %1123 = vmatpush.msra.mxu0 %v1103
        %1124 = vmatmul.f32.gmra.mxu0 %v942
        %v1125 = vpop.f32.mrf.mxu0
        %v1126 = vadd.f32 %v939, %v1125
        %1127 = vdwg.mxu0
        %1128 = vmatpush.msra.mxu0 0.0
        %1129 = vmatpush.msra.mxu0 0.0
        %1130 = vmatpush.msra.mxu0 0.0
        %1131 = vmatpush.msra.mxu0 0.0
        %1132 = vmatpush.msra.mxu0 0.0
        %1133 = vmatpush.msra.mxu0 0.0
        %1134 = vmatpush.msra.mxu0 0.0
        %1135 = vmatpush.msra.mxu0 0.0
        %1136 = vmatpush.msra.mxu0 0.0
        %1137 = vmatpush.msra.mxu0 0.0
        %1138 = vmatpush.msra.mxu0 0.0
        %1139 = vmatpush.msra.mxu0 0.0
        %1140 = vmatpush.msra.mxu0 0.0
        %1141 = vmatpush.msra.mxu0 0.0
        %1142 = vmatpush.msra.mxu0 0.0
        %1143 = vmatpush.msra.mxu0 %v1106
        %1144 = vmatmul.f32.gmra.mxu0 %v942
        %v1145 = vpop.f32.mrf.mxu0
        %v1146 = vadd.f32 %v939, %v1145
        %1147 = vdwg.mxu0
        %v1148 = vmax.f32 %v1126, 0.0
        %v1149 = vmax.f32 %v1146, 0.0
        %s1150 = scalar_lea.vmem %s315, 48 [#allocation8]
        %1151 = vst [vmem:[%s1150] sm:$0xff] %v1148
        %1152 = vst [vmem:[%s1150 + $0x8] sm:$0xff] %v1149
        %s1153 = sand.u32 %s185, 1
        %s1154 = scalar_lea.sflag [#allocation5], %s1153
        %s1155 = sand.u32 %s185, 1
        %s1156 = smul.addr %s1155, 64
        %s1157 = scalar_lea.vmem [#allocation8], %s1156
        // Predicated region
        $region57: #{tpu_custom_call.1} parent=47 // pred_check
          %p1158 = pneg %p195
        $region58: #{tpu_custom_call.1} parent=47 // pred_check_branch
          %1160 = sbr.rel (%p1158) target = $region60
        $region59: #{tpu_custom_call.1} parent=47 // pred_region
          %1162 = vsyncadd %s1154, 0
          %s1163 = smul.addr %s25, 8
          %s1164 = smul.addr %s1163, 8
          %s1165 = scalar_lea.hbm %s7, %s1164
          %s1166 = sshll.u32 %s1157, 4
          %s1167 = int_to_ptr.vmem [resolvable:$true] %s1166
          %s1168 = sshll.u32 %s1165, 4
          %s1169 = int_to_ptr.hbm [resolvable:$true] %s1168
          %1174 = dma.vmem_to_hbm [thread:$0]  %s1167, 1024, %s1169, %s1154, 256, 256, 16
        $region60: #{tpu_custom_call.1} parent=47 // pred_fallthru
          _
      $region48: #{tpu_custom_call.1} parent=5 // pred_fallthru
        _
      %p1175 = scmp.le.s32.totalorder 2, %s20
      // Predicated region
      $region61: #{tpu_custom_call.1} parent=5 // pred_check
        %p1176 = pneg %p1175
      $region62: #{tpu_custom_call.1} parent=5 // pred_check_branch
        %1178 = sbr.rel (%p1176) target = $region64
      $region63: #{tpu_custom_call.1} parent=5 // pred_region
        %s1179 = ssub.s32 %s20, 2
        // Predicated region
        $region65: #{tpu_custom_call.1} parent=63 // pred_check
          %p1180 = pneg %p201
        $region66: #{tpu_custom_call.1} parent=63 // pred_check_branch
          %1182 = sbr.rel (%p1180) target = $region68
        $region67: #{tpu_custom_call.1} parent=63 // pred_region
          %s1183 = sand.u32 %s186, 1
          %s1184 = scalar_lea.sflag [#allocation5], %s1183
          %s1185 = sand.u32 %s186, 1
          %s1186 = smul.addr %s1185, 64
          %s1187 = scalar_lea.vmem [#allocation8], %s1186
          %1189 = dma.done %s1184, 1024
        $region68: #{tpu_custom_call.1} parent=63 // pred_fallthru
          _
      $region64: #{tpu_custom_call.1} parent=5 // pred_fallthru
        _
    $region6: #{tpu_custom_call.1} parent=1 // loop_footer
      %s24 = sadd.s32 1, %s20
    $region7: #{tpu_custom_call.1} parent=1 // loop_footer_branch
      %19 = sbr.rel target = $region3
    $region8: #{tpu_custom_call.1} parent=1 // loop_exit
      _
    %1190 = vsyncpa [#allocation4], 1
    %s1191 = scalar_lea.sflag [#allocation4], 1
    %1192 = vsyncpa %s1191, 1
    %1193 = vsyncpa [#allocation7], 1
    %1194 = vsyncpa [#allocation5], 1
    %s1195 = scalar_lea.sflag [#allocation5], 1
    %1196 = vsyncpa %s1195, 1

</llo_original>
